<compile_context>
chip_gen: v7x
topology: tpu7x:2x2x1
jax: 0.10.0
libtpu: 0.0.40
codegen_flags: <defaults>
</compile_context>

<pallas_src>
import functools

import jax
import jax.numpy as jnp
from jax import lax
from jax.experimental import pallas as pl
from jax.experimental.pallas import tpu as pltpu


def _log_sigmoid(x):
    # numerically stable log(sigmoid(x)) = min(x, 0) - log1p(exp(-|x|))
    return jnp.minimum(x, 0.0) - jnp.log1p(jnp.exp(-jnp.abs(x)))


def _skipgram_neg_kernel(batch, tile_b,
                         c_idx_ref, o_idx_ref, n_idx_ref,
                         emb_c_hbm, emb_o_hbm,
                         out_ref,
                         emb_c_vmem, emb_o_vmem, dma_sems, acc_ref):
    pid = pl.program_id(0)

    # ---- one-time setup (grid axis is 'arbitrary' => sequential) -----------
    @pl.when(pid == 0)
    def _init():
        # Single-buffered table residency: DMA each (V, E) table into VMEM
        # scratch exactly once for the whole grid.
        cp_c = pltpu.make_async_copy(emb_c_hbm, emb_c_vmem, dma_sems.at[0])
        cp_o = pltpu.make_async_copy(emb_o_hbm, emb_o_vmem, dma_sems.at[1])
        cp_c.start()
        cp_o.start()
        cp_c.wait()
        cp_o.wait()
        acc_ref[...] = jnp.zeros_like(acc_ref)

    voc = emb_c_vmem.shape[0]
    num_neg = n_idx_ref.shape[1]
    c_dtype = emb_c_vmem.dtype
    o_dtype = emb_o_vmem.dtype

    c_idx = c_idx_ref[...]                                      # (TB, 1) int32
    o_idx = o_idx_ref[...]                                      # (TB, 1) int32
    n_idx = n_idx_ref[...]                                      # (TB, K) int32

    # ---- selectors: exact 0/1 one-hots / small-integer multiplicities ------
    # (selection weights are exactly representable in the tables' dtype)
    vocab_iota = lax.broadcasted_iota(jnp.int32, (tile_b, voc), 1)
    onehot_c = (vocab_iota == c_idx).astype(c_dtype)            # (TB, V)
    onehot_o = (vocab_iota == o_idx).astype(o_dtype)            # (TB, V)
    counts_n = jnp.zeros((tile_b, voc), jnp.float32)
    for k in range(num_neg):                                    # static, small K
        counts_n = counts_n + (vocab_iota == n_idx[:, k:k + 1]).astype(jnp.float32)
    counts_n = counts_n.astype(o_dtype)

    # ---- fused gathers on the MXU -------------------------------------------
    #   center            = onehot_c @ E_c                  (TB , E)
    #   [outside; negsum] = [onehot_o ; counts_n] @ E_o     (2TB, E)
    # HIGHEST precision keeps the f32 one-hot row selection bit-exact; the
    # f32 cast happens implicitly on the gathered rows only (O(TB*E)).
    center = jnp.dot(onehot_c, emb_c_vmem[...],
                     preferred_element_type=jnp.float32,
                     precision=lax.Precision.HIGHEST)           # (TB, E) f32
    sel_o = jnp.concatenate([onehot_o, counts_n], axis=0)       # (2TB, V)
    rows_o = jnp.dot(sel_o, emb_o_vmem[...],
                     preferred_element_type=jnp.float32,
                     precision=lax.Precision.HIGHEST)           # (2TB, E) f32
    outside = rows_o[:tile_b]                                   # (TB, E)
    neg_sum = rows_o[tile_b:]                                   # (TB, E) = sum_k n_k

    # ---- scores: two plain lane reductions (no activation concat) ----------
    uovc = jnp.sum(outside * center, axis=-1, keepdims=True)        # (TB, 1)
    ukvc_sum = -jnp.sum(neg_sum * center, axis=-1, keepdims=True)   # (TB, 1)

    # single log-sigmoid (EUP) pass over both score columns
    dots = jnp.concatenate([uovc, ukvc_sum], axis=1)            # (TB, 2)
    loss = jnp.sum(_log_sigmoid(dots), axis=1, keepdims=True)   # (TB, 1)

    # mask rows beyond the true batch (ragged / alignment-padded final tile)
    row = pid * tile_b + lax.broadcasted_iota(jnp.int32, (tile_b, 1), 0)
    loss = jnp.where(row < batch, loss, 0.0)

    acc_ref[...] += jnp.sum(loss, axis=0, keepdims=True)        # running sum

    @pl.when(pid == pl.num_programs(0) - 1)
    def _finalize():
        out_ref[...] = -acc_ref[...] / jnp.float32(batch)       # -mean(loss)


def _round_up(x, m):
    return (x + m - 1) // m * m


def skipgram_neg_forward(emb_center, emb_outside, center_idx, outside_idx,
                         negative_idx, *, max_tile_b=256):
    """emb_*: (V, E) float; center_idx/outside_idx: (B, 1) int; negative_idx:
    (B, K) int. Returns scalar float32 loss (== -mean(loss) of the module)."""
    voc, emb = emb_center.shape
    batch = center_idx.shape[0]
    num_neg = negative_idx.shape[1]

    # Sublane-aligned batch tile; modest default keeps the (TB, V) selector
    # masks within v5e's 16 MiB scoped-VMEM default as well.
    batch8 = _round_up(batch, 8)
    tile_b = min(_round_up(max_tile_b, 8), batch8)
    num_tiles = pl.cdiv(batch8, tile_b)

    def prep(x):
        x = x.astype(jnp.int32)
        if x.shape[0] != batch8:   # minimal (<8 row) sublane-alignment pad only
            x = jnp.pad(x, ((0, batch8 - x.shape[0]), (0, 0)))
        return x

    c_idx = prep(center_idx)
    o_idx = prep(outside_idx)
    n_idx = prep(negative_idx)

    kernel = functools.partial(_skipgram_neg_kernel, batch, tile_b)

    out = pl.pallas_call(
        kernel,
        out_shape=jax.ShapeDtypeStruct((1, 1), jnp.float32),
        grid=(num_tiles,),
        in_specs=[
            pl.BlockSpec((tile_b, 1), lambda i: (i, 0)),          # center idx tile
            pl.BlockSpec((tile_b, 1), lambda i: (i, 0)),          # outside idx tile
            pl.BlockSpec((tile_b, num_neg), lambda i: (i, 0)),    # negative idx tile
            pl.BlockSpec(memory_space=pl.ANY),                    # E_c stays in HBM
            pl.BlockSpec(memory_space=pl.ANY),                    # E_o stays in HBM
        ],
        out_specs=pl.BlockSpec((1, 1), lambda i: (0, 0)),
        scratch_shapes=[
            pltpu.VMEM((voc, emb), emb_center.dtype),    # single-buffered E_c
            pltpu.VMEM((voc, emb), emb_outside.dtype),   # single-buffered E_o
            pltpu.SemaphoreType.DMA((2,)),               # table-load DMA sems
            pltpu.VMEM((1, 1), jnp.float32),             # loss accumulator
        ],
        compiler_params=pltpu.CompilerParams(
            dimension_semantics=("arbitrary",)),
    )(c_idx, o_idx, n_idx, emb_center, emb_outside)
    return out[0, 0]


def _reference(emb_center, emb_outside, center_idx, outside_idx, negative_idx):
    c = jnp.take(emb_center, center_idx[:, 0], axis=0)          # (B, E)
    o = jnp.take(emb_outside, outside_idx[:, 0], axis=0)        # (B, E)
    n = jnp.take(emb_outside, negative_idx, axis=0)             # (B, K, E)
    uovc = jnp.sum(o * c, axis=-1, keepdims=True)               # (B, 1)
    ukvc = -jnp.sum(n * c[:, None, :], axis=-1)                 # (B, K)
    ukvc_sum = jnp.sum(ukvc, axis=1, keepdims=True)             # (B, 1)
    loss = jax.nn.log_sigmoid(uovc) + jax.nn.log_sigmoid(ukvc_sum)
    return -jnp.mean(loss)


if __name__ == "__main__":
    voc_size, emb_size = 50, 32
    batch, num_neg = 8, 5

    key = jax.random.PRNGKey(0)
    k_wc, k_wo, k_c, k_o, k_n = jax.random.split(key, 5)

    # Deterministic parameter init (nn.Embedding default: N(0, 1)).
    emb_center = jax.random.normal(k_wc, (voc_size, emb_size), dtype=jnp.float32)
    emb_outside = jax.random.normal(k_wo, (voc_size, emb_size), dtype=jnp.float32)

    center = jax.random.randint(k_c, (batch, 1), 0, voc_size, dtype=jnp.int32)
    outside = jax.random.randint(k_o, (batch, 1), 0, voc_size, dtype=jnp.int32)
    negative = jax.random.randint(k_n, (batch, num_neg), 0, voc_size,
                                  dtype=jnp.int32)

    loss = skipgram_neg_forward(emb_center, emb_outside, center, outside,
                                negative)
    loss = jax.block_until_ready(loss)

    ref = _reference(emb_center, emb_outside, center, outside, negative)
    ref = jax.block_until_ready(ref)

    assert jnp.allclose(loss, ref, rtol=1e-5, atol=1e-5), (loss, ref)
    print("KERNEL_OK")
</pallas_src>

<mosaic_0001>
module attributes {stable_mosaic.version = 11 : i64} {
  func.func @_skipgram_neg_kernel(%arg0: i32, %arg1: memref<8x1xi32, #tpu.memory_space<vmem>>, %arg2: memref<8x1xi32, #tpu.memory_space<vmem>>, %arg3: memref<8x5xi32, #tpu.memory_space<vmem>>, %arg4: memref<50x32xf32, #tpu.memory_space<any>>, %arg5: memref<50x32xf32, #tpu.memory_space<any>>, %arg6: memref<1x1xf32, #tpu.memory_space<vmem>>, %arg7: memref<50x32xf32, #tpu.memory_space<vmem>>, %arg8: memref<50x32xf32, #tpu.memory_space<vmem>>, %arg9: memref<2x!tpu.dma_semaphore, #tpu.memory_space<semaphore_mem>>, %arg10: memref<1x1xf32, #tpu.memory_space<vmem>>) attributes {dimension_semantics = [#tpu.dimension_semantics<arbitrary>], iteration_bounds = array<i64: 1>, scalar_prefetch = 0 : i64, scratch_operands = 4 : i64, tpu.core_type = #tpu.core_type<tc>, window_params = [{transform_indices = @transform_0, window_bounds = array<i64: 8, 1>}, {transform_indices = @transform_1, window_bounds = array<i64: 8, 1>}, {transform_indices = @transform_2, window_bounds = array<i64: 8, 5>}, {}, {}, {pipeline_mode = #tpu.pipeline_mode<synchronous>, transform_indices = @transform_5, window_bounds = array<i64: 1, 1>}]} {
    %c0_i32 = arith.constant 0 : i32
    %0 = arith.cmpi eq, %arg0, %c0_i32 : i32
    %1 = arith.extui %0 : i1 to i32
    %c0_i32_0 = arith.constant 0 : i32
    %2 = arith.cmpi ne, %1, %c0_i32_0 : i32
    scf.if %2 {
      %c0_i32_27 = arith.constant 0 : i32
      %88 = tpu.memref_slice %arg9[%c0_i32_27] : memref<2x!tpu.dma_semaphore, #tpu.memory_space<semaphore_mem>> -> memref<1x!tpu.dma_semaphore, #tpu.memory_space<semaphore_mem>>
      %89 = tpu.memref_squeeze %88 : memref<1x!tpu.dma_semaphore, #tpu.memory_space<semaphore_mem>> -> memref<!tpu.dma_semaphore, #tpu.memory_space<semaphore_mem>>
      tpu.enqueue_dma source(%arg4 : memref<50x32xf32, #tpu.memory_space<any>>) target(%arg7 : memref<50x32xf32, #tpu.memory_space<vmem>>) target_semaphore(%89 : memref<!tpu.dma_semaphore, #tpu.memory_space<semaphore_mem>>)
      %c1_i32 = arith.constant 1 : i32
      %90 = tpu.memref_slice %arg9[%c1_i32] : memref<2x!tpu.dma_semaphore, #tpu.memory_space<semaphore_mem>> -> memref<1x!tpu.dma_semaphore, #tpu.memory_space<semaphore_mem>>
      %91 = tpu.memref_squeeze %90 : memref<1x!tpu.dma_semaphore, #tpu.memory_space<semaphore_mem>> -> memref<!tpu.dma_semaphore, #tpu.memory_space<semaphore_mem>>
      tpu.enqueue_dma source(%arg5 : memref<50x32xf32, #tpu.memory_space<any>>) target(%arg8 : memref<50x32xf32, #tpu.memory_space<vmem>>) target_semaphore(%91 : memref<!tpu.dma_semaphore, #tpu.memory_space<semaphore_mem>>)
      %c0_i32_28 = arith.constant 0 : i32
      %92 = tpu.memref_slice %arg9[%c0_i32_28] : memref<2x!tpu.dma_semaphore, #tpu.memory_space<semaphore_mem>> -> memref<1x!tpu.dma_semaphore, #tpu.memory_space<semaphore_mem>>
      %93 = tpu.memref_squeeze %92 : memref<1x!tpu.dma_semaphore, #tpu.memory_space<semaphore_mem>> -> memref<!tpu.dma_semaphore, #tpu.memory_space<semaphore_mem>>
      tpu.wait_dma2 semaphore(%93 : memref<!tpu.dma_semaphore, #tpu.memory_space<semaphore_mem>>) src(%arg4 : memref<50x32xf32, #tpu.memory_space<any>>) dst(%arg7 : memref<50x32xf32, #tpu.memory_space<vmem>>)
      %c1_i32_29 = arith.constant 1 : i32
      %94 = tpu.memref_slice %arg9[%c1_i32_29] : memref<2x!tpu.dma_semaphore, #tpu.memory_space<semaphore_mem>> -> memref<1x!tpu.dma_semaphore, #tpu.memory_space<semaphore_mem>>
      %95 = tpu.memref_squeeze %94 : memref<1x!tpu.dma_semaphore, #tpu.memory_space<semaphore_mem>> -> memref<!tpu.dma_semaphore, #tpu.memory_space<semaphore_mem>>
      tpu.wait_dma2 semaphore(%95 : memref<!tpu.dma_semaphore, #tpu.memory_space<semaphore_mem>>) src(%arg5 : memref<50x32xf32, #tpu.memory_space<any>>) dst(%arg8 : memref<50x32xf32, #tpu.memory_space<vmem>>)
      %cst_30 = arith.constant 0.000000e+00 : f32
      %96 = vector.broadcast %cst_30 : f32 to vector<1x1xf32>
      %c0_31 = arith.constant 0 : index
      %c0_32 = arith.constant 0 : index
      %97 = vector.load %arg10[%c0_31, %c0_32] : memref<1x1xf32, #tpu.memory_space<vmem>>, vector<1x1xf32>
      tpu.vector_store %arg10[%c0_31, %c0_32], %96 {strides = array<i32>} : memref<1x1xf32, #tpu.memory_space<vmem>>, vector<1x1xf32>,
    } else {
    }
    %c0 = arith.constant 0 : index
    %c0_1 = arith.constant 0 : index
    %3 = vector.load %arg1[%c0, %c0_1] : memref<8x1xi32, #tpu.memory_space<vmem>>, vector<8x1xi32>
    %c0_2 = arith.constant 0 : index
    %c0_3 = arith.constant 0 : index
    %4 = vector.load %arg2[%c0_2, %c0_3] : memref<8x1xi32, #tpu.memory_space<vmem>>, vector<8x1xi32>
    %c0_4 = arith.constant 0 : index
    %c0_5 = arith.constant 0 : index
    %5 = vector.load %arg3[%c0_4, %c0_5] : memref<8x5xi32, #tpu.memory_space<vmem>>, vector<8x5xi32>
    %6 = tpu.iota {dimensions = array<i32: 1>} : vector<8x50xi32>
    %7 = vector.broadcast %3 : vector<8x1xi32> to vector<8x50xi32>
    %8 = arith.cmpi eq, %6, %7 : vector<8x50xi32>
    %9 = arith.extui %8 : vector<8x50xi1> to vector<8x50xi32>
    %10 = arith.sitofp %9 : vector<8x50xi32> to vector<8x50xf32>
    %11 = vector.broadcast %4 : vector<8x1xi32> to vector<8x50xi32>
    %12 = arith.cmpi eq, %6, %11 : vector<8x50xi32>
    %13 = arith.extui %12 : vector<8x50xi1> to vector<8x50xi32>
    %14 = arith.sitofp %13 : vector<8x50xi32> to vector<8x50xf32>
    %cst = arith.constant 0.000000e+00 : f32
    %15 = vector.broadcast %cst : f32 to vector<8x50xf32>
    %16 = vector.extract_strided_slice %5 {offsets = [0, 0], sizes = [8, 1], strides = [1, 1]} : vector<8x5xi32> to vector<8x1xi32>
    %17 = vector.broadcast %16 : vector<8x1xi32> to vector<8x50xi32>
    %18 = arith.cmpi eq, %6, %17 : vector<8x50xi32>
    %19 = arith.extui %18 : vector<8x50xi1> to vector<8x50xi32>
    %20 = arith.sitofp %19 : vector<8x50xi32> to vector<8x50xf32>
    %21 = arith.addf %15, %20 : vector<8x50xf32>
    %22 = vector.extract_strided_slice %5 {offsets = [0, 1], sizes = [8, 1], strides = [1, 1]} : vector<8x5xi32> to vector<8x1xi32>
    %23 = vector.broadcast %22 : vector<8x1xi32> to vector<8x50xi32>
    %24 = arith.cmpi eq, %6, %23 : vector<8x50xi32>
    %25 = arith.extui %24 : vector<8x50xi1> to vector<8x50xi32>
    %26 = arith.sitofp %25 : vector<8x50xi32> to vector<8x50xf32>
    %27 = arith.addf %21, %26 : vector<8x50xf32>
    %28 = vector.extract_strided_slice %5 {offsets = [0, 2], sizes = [8, 1], strides = [1, 1]} : vector<8x5xi32> to vector<8x1xi32>
    %29 = vector.broadcast %28 : vector<8x1xi32> to vector<8x50xi32>
    %30 = arith.cmpi eq, %6, %29 : vector<8x50xi32>
    %31 = arith.extui %30 : vector<8x50xi1> to vector<8x50xi32>
    %32 = arith.sitofp %31 : vector<8x50xi32> to vector<8x50xf32>
    %33 = arith.addf %27, %32 : vector<8x50xf32>
    %34 = vector.extract_strided_slice %5 {offsets = [0, 3], sizes = [8, 1], strides = [1, 1]} : vector<8x5xi32> to vector<8x1xi32>
    %35 = vector.broadcast %34 : vector<8x1xi32> to vector<8x50xi32>
    %36 = arith.cmpi eq, %6, %35 : vector<8x50xi32>
    %37 = arith.extui %36 : vector<8x50xi1> to vector<8x50xi32>
    %38 = arith.sitofp %37 : vector<8x50xi32> to vector<8x50xf32>
    %39 = arith.addf %33, %38 : vector<8x50xf32>
    %40 = vector.extract_strided_slice %5 {offsets = [0, 4], sizes = [8, 1], strides = [1, 1]} : vector<8x5xi32> to vector<8x1xi32>
    %41 = vector.broadcast %40 : vector<8x1xi32> to vector<8x50xi32>
    %42 = arith.cmpi eq, %6, %41 : vector<8x50xi32>
    %43 = arith.extui %42 : vector<8x50xi1> to vector<8x50xi32>
    %44 = arith.sitofp %43 : vector<8x50xi32> to vector<8x50xf32>
    %45 = arith.addf %39, %44 : vector<8x50xf32>
    %c0_6 = arith.constant 0 : index
    %c0_7 = arith.constant 0 : index
    %46 = vector.load %arg7[%c0_6, %c0_7] : memref<50x32xf32, #tpu.memory_space<vmem>>, vector<50x32xf32>
    %cst_8 = arith.constant dense<0.000000e+00> : vector<8x32xf32>
    %47 = tpu.matmul %10, %46, %cst_8 {dimension_numbers = #tpu.dot_dimension_numbers<[1], [0], [0], [1], [0, 0, 1, 1], [], []>, precision = #tpu.contract_precision<fp32>} : vector<8x50xf32>, vector<50x32xf32>, vector<8x32xf32> -> vector<8x32xf32>
    %48 = tpu.concatenate %14, %45 in 0 : vector<8x50xf32>, vector<8x50xf32> -> vector<16x50xf32>
    %c0_9 = arith.constant 0 : index
    %c0_10 = arith.constant 0 : index
    %49 = vector.load %arg8[%c0_9, %c0_10] : memref<50x32xf32, #tpu.memory_space<vmem>>, vector<50x32xf32>
    %cst_11 = arith.constant dense<0.000000e+00> : vector<16x32xf32>
    %50 = tpu.matmul %48, %49, %cst_11 {dimension_numbers = #tpu.dot_dimension_numbers<[1], [0], [0], [1], [0, 0, 1, 1], [], []>, precision = #tpu.contract_precision<fp32>} : vector<16x50xf32>, vector<50x32xf32>, vector<16x32xf32> -> vector<16x32xf32>
    %51 = vector.extract_strided_slice %50 {offsets = [0, 0], sizes = [8, 32], strides = [1, 1]} : vector<16x32xf32> to vector<8x32xf32>
    %52 = vector.extract_strided_slice %50 {offsets = [8, 0], sizes = [8, 32], strides = [1, 1]} : vector<16x32xf32> to vector<8x32xf32>
    %53 = arith.mulf %51, %47 : vector<8x32xf32>
    %cst_12 = arith.constant dense<0.000000e+00> : vector<8xf32>
    %54 = vector.multi_reduction <add>, %53, %cst_12 [1] : vector<8x32xf32> to vector<8xf32>
    %55 = vector.shape_cast %54 : vector<8xf32> to vector<8x1xf32>
    %56 = arith.mulf %52, %47 : vector<8x32xf32>
    %cst_13 = arith.constant dense<0.000000e+00> : vector<8xf32>
    %57 = vector.multi_reduction <add>, %56, %cst_13 [1] : vector<8x32xf32> to vector<8xf32>
    %58 = vector.shape_cast %57 : vector<8xf32> to vector<8x1xf32>
    %cst_14 = arith.constant 0.000000e+00 : f32
    %59 = vector.broadcast %cst_14 : f32 to vector<8x1xf32>
    %60 = arith.subf %59, %58 : vector<8x1xf32>
    %61 = tpu.concatenate %55, %60 in 1 : vector<8x1xf32>, vector<8x1xf32> -> vector<8x2xf32>
    %cst_15 = arith.constant 0.000000e+00 : f32
    %62 = vector.broadcast %cst_15 : f32 to vector<8x2xf32>
    %63 = arith.minimumf %61, %62 : vector<8x2xf32>
    %64 = math.absf %61 : vector<8x2xf32>
    %cst_16 = arith.constant 0.000000e+00 : f32
    %65 = vector.broadcast %cst_16 : f32 to vector<8x2xf32>
    %66 = arith.subf %65, %64 : vector<8x2xf32>
    %67 = math.exp %66 : vector<8x2xf32>
    %68 = math.log1p %67 : vector<8x2xf32>
    %69 = arith.subf %63, %68 : vector<8x2xf32>
    %cst_17 = arith.constant dense<0.000000e+00> : vector<8xf32>
    %70 = vector.multi_reduction <add>, %69, %cst_17 [1] : vector<8x2xf32> to vector<8xf32>
    %71 = vector.shape_cast %70 : vector<8xf32> to vector<8x1xf32>
    %c8_i32 = arith.constant 8 : i32
    %72 = arith.muli %arg0, %c8_i32 : i32
    %73 = tpu.iota {dimensions = array<i32: 0>} : vector<8x1xi32>
    %74 = vector.broadcast %72 : i32 to vector<8x1xi32>
    %75 = arith.addi %74, %73 : vector<8x1xi32>
    %c8_i32_18 = arith.constant 8 : i32
    %76 = vector.broadcast %c8_i32_18 : i32 to vector<8x1xi32>
    %77 = arith.cmpi slt, %75, %76 : vector<8x1xi32>
    %cst_19 = arith.constant 0.000000e+00 : f32
    %78 = vector.broadcast %cst_19 : f32 to vector<8x1xf32>
    %79 = arith.select %77, %71, %78 : vector<8x1xi1>, vector<8x1xf32>
    %c0_20 = arith.constant 0 : index
    %c0_21 = arith.constant 0 : index
    %80 = vector.load %arg10[%c0_20, %c0_21] : memref<1x1xf32, #tpu.memory_space<vmem>>, vector<1x1xf32>
    %cst_22 = arith.constant dense<0.000000e+00> : vector<1xf32>
    %81 = vector.multi_reduction <add>, %79, %cst_22 [0] : vector<8x1xf32> to vector<1xf32>
    %82 = vector.shape_cast %81 : vector<1xf32> to vector<1x1xf32>
    %83 = arith.addf %80, %82 : vector<1x1xf32>
    %c0_23 = arith.constant 0 : index
    %c0_24 = arith.constant 0 : index
    %84 = vector.load %arg10[%c0_23, %c0_24] : memref<1x1xf32, #tpu.memory_space<vmem>>, vector<1x1xf32>
    tpu.vector_store %arg10[%c0_23, %c0_24], %83 {strides = array<i32>} : memref<1x1xf32, #tpu.memory_space<vmem>>, vector<1x1xf32>,
    %c0_i32_25 = arith.constant 0 : i32
    %85 = arith.cmpi eq, %arg0, %c0_i32_25 : i32
    %86 = arith.extui %85 : i1 to i32
    %c0_i32_26 = arith.constant 0 : i32
    %87 = arith.cmpi ne, %86, %c0_i32_26 : i32
    scf.if %87 {
      %c0_27 = arith.constant 0 : index
      %c0_28 = arith.constant 0 : index
      %88 = vector.load %arg10[%c0_27, %c0_28] : memref<1x1xf32, #tpu.memory_space<vmem>>, vector<1x1xf32>
      %cst_29 = arith.constant 0.000000e+00 : f32
      %89 = vector.broadcast %cst_29 : f32 to vector<1x1xf32>
      %90 = arith.subf %89, %88 : vector<1x1xf32>
      %cst_30 = arith.constant 8.000000e+00 : f32
      %91 = vector.broadcast %cst_30 : f32 to vector<1x1xf32>
      %92 = arith.divf %90, %91 : vector<1x1xf32>
      %c0_31 = arith.constant 0 : index
      %c0_32 = arith.constant 0 : index
      %93 = vector.load %arg6[%c0_31, %c0_32] : memref<1x1xf32, #tpu.memory_space<vmem>>, vector<1x1xf32>
      tpu.vector_store %arg6[%c0_31, %c0_32], %92 {strides = array<i32>} : memref<1x1xf32, #tpu.memory_space<vmem>>, vector<1x1xf32>,
    } else {
    }
    return
  }
  func.func @transform_0(%arg0: i32) -> (i32, i32) {
    %c0_i32 = arith.constant 0 : i32
    %c0_i32_0 = arith.constant 0 : i32
    return %arg0, %c0_i32 : i32, i32
  }
  func.func @transform_1(%arg0: i32) -> (i32, i32) {
    %c0_i32 = arith.constant 0 : i32
    %c0_i32_0 = arith.constant 0 : i32
    return %arg0, %c0_i32 : i32, i32
  }
  func.func @transform_2(%arg0: i32) -> (i32, i32) {
    %c0_i32 = arith.constant 0 : i32
    %c0_i32_0 = arith.constant 0 : i32
    return %arg0, %c0_i32 : i32, i32
  }
  func.func @transform_5(%arg0: i32) -> (i32, i32) {
    %c0_i32 = arith.constant 0 : i32
    %c0_i32_0 = arith.constant 0 : i32
    %c0_i32_1 = arith.constant 0 : i32
    return %c0_i32, %c0_i32_0 : i32, i32
  }
}

</mosaic_0001>

<llo_original>
// kernel: tpu_custom_call.1
$region0: #{tpu_custom_call.1}
  #allocation0 [shape = 'u32[]', space=smem, size = 0x4, offset = 0x4, fixed_abs, tag = 'smem constant byte address 0x4 - core index']
  #allocation1 [shape = 'u32[144,128]{1,0:T(1,128)}', space=vmem, size = 0x12000, scoped, tag = 'internal scratch']
  #allocation2 [shape = 'f32[50,32]{1,0:T(8,128)}', space=vmem, size = 0x7000, scoped, tag = 'scratch operand']
  #allocation3 [shape = 'f32[50,32]{1,0:T(8,128)}', space=vmem, size = 0x7000, scoped, tag = 'scratch operand']
  #allocation4 [shape = 's32[2]{0}', space=sflag, size = 0x8, scoped, tag = 'scratch operand']
  #allocation5 [shape = 'f32[1,1]{1,0:T(1,128)}', space=vmem, size = 0x200, scoped, tag = 'scratch operand']
  #allocation8 [shape = 's32[]', space=sflag, size = 0x4, offset = 0, fixed_abs, tag = 'sflag constant byte address 0x0 - dummy sync flag']
  #allocation9 [shape = 's32[]', space=sflag, size = 0x4, offset = 0, fixed_abs, tag = 'sflag constant byte address 0x0 - dummy sync flag']
  %s0 = inlined_call_operand.vmem [shape: s32[8,1], index: 0, kind: input, shape index: {}]
  %s1 = inlined_call_operand.vmem [shape: s32[8,1], index: 1, kind: input, shape index: {}]
  %s2 = inlined_call_operand.vmem [shape: s32[8,5], index: 2, kind: input, shape index: {}]
  %s3 = inlined_call_operand.vmem [shape: f32[50,32], index: 3, kind: input, shape index: {}]
  %s4 = inlined_call_operand.vmem [shape: f32[50,32], index: 4, kind: input, shape index: {}]
  %s5 = inlined_call_operand.hbm [shape: f32[1,1], index: 5, kind: output, shape index: {}]
  %s6 = sld [smem:[#allocation0]]
  $region104: #{tpu_custom_call.1} parent=0
    _
  %s8 = ssub.s32 1, %s6
  %s9 = scalar_select 0, %s8, %s6
  $region1: #{tpu_custom_call.1} parent=0
    #allocation6 [shape = 'u8[512]{0}', space=vmem, size = 0x400, scoped, tag = 'output window, operand 0, single buffered']
    #allocation7 [shape = 's32[1]{0}', space=sflag, size = 0x4, scoped, tag = 'scoped memory for tpu_custom_call.1']
    %10 = vsyncpa [#allocation7], 0
    // Predicated region
    $region2: #{tpu_custom_call.1} parent=1 // pred_check
      _
    $region3: #{tpu_custom_call.1} parent=1 // pred_check_branch
      %12 = sbr.rel (0) target = $region5
    $region4: #{tpu_custom_call.1} parent=1 // pred_region
      _
    $region5: #{tpu_custom_call.1} parent=1 // pred_fallthru
      _
    // Predicated region
    $region6: #{tpu_custom_call.1} parent=1 // pred_check
      _
    $region7: #{tpu_custom_call.1} parent=1 // pred_check_branch
      %14 = sbr.rel (0) target = $region9
    $region8: #{tpu_custom_call.1} parent=1 // pred_region
      _
    $region9: #{tpu_custom_call.1} parent=1 // pred_fallthru
      _
    // Predicated region
    $region10: #{tpu_custom_call.1} parent=1 // pred_check
      _
    $region11: #{tpu_custom_call.1} parent=1 // pred_check_branch
      %16 = sbr.rel (0) target = $region13
    $region12: #{tpu_custom_call.1} parent=1 // pred_region
      _
    $region13: #{tpu_custom_call.1} parent=1 // pred_fallthru
      _
    %p17 = scmp.eq.s32.totalorder 0, 0
    // Predicated region
    $region14: #{tpu_custom_call.1} parent=1 // pred_check
      %p18 = pneg %p17
    $region15: #{tpu_custom_call.1} parent=1 // pred_check_branch
      %20 = sbr.rel (%p18) target = $region17
    $region16: #{tpu_custom_call.1} parent=1 // pred_region
      %p22 = scmp.lt.u32.totalorder 50, 8
      %p23 = pneg %p22
      // Predicated region
      $region18: #{tpu_custom_call.1} parent=16 // pred_check
        _
      $region19: #{tpu_custom_call.1} parent=16 // pred_check_branch
        %25 = sbr.rel (%p22) target = $region21
      $region20: #{tpu_custom_call.1} parent=16 // pred_region
        %s40 = sand.u32 50, 7
        %p41 = scmp.eq.s32.totalorder %s40, 0
        %p42 = pneg %p41
        // Predicated region
        $region33: #{tpu_custom_call.1} parent=20 // pred_check
          _
        $region34: #{tpu_custom_call.1} parent=20 // pred_check_branch
          %44 = sbr.rel (%p41) target = $region36
        $region35: #{tpu_custom_call.1} parent=20 // pred_region
          %s45 = sand.u32 50, 7
          %s46 = ssub.s32 50, %s45
          %s47 = scalar_lea.vmem %s3, %s46
          %s48 = ssub.s32 50, %s45
          %s49 = scalar_lea.vmem [#allocation2], %s48
          loop: start=0, step=1, limit=1
          $region37: #{tpu_custom_call.1} parent=35 // loop_pre_header
            _
          $region38: #{tpu_custom_call.1} parent=35 // loop_header
            %s51 = sphi 0, %s55
            %p52 = scmp.ge.s32.totalorder %s51, 1
            %s56 = sphi %s3, %s3
            %s57 = sphi [#allocation2], [#allocation2]
          $region39: #{tpu_custom_call.1} parent=35 // loop_header_branch
            %54 = sbr.rel (%p52) target = $region43
          $region40: #{tpu_custom_call.1} parent=35 // loop_body
            %v58 = vld [vmem:[%s56] sm:$0xff]
            %59 = vst [vmem:[%s57] sm:$0xff] %v58
            %v60 = vld [vmem:[%s56 + $0x8] sm:$0xff]
            %61 = vst [vmem:[%s57 + $0x8] sm:$0xff] %v60
            %v62 = vld [vmem:[%s56 + $0x10] sm:$0xff]
            %63 = vst [vmem:[%s57 + $0x10] sm:$0xff] %v62
            %v64 = vld [vmem:[%s56 + $0x18] sm:$0xff]
            %65 = vst [vmem:[%s57 + $0x18] sm:$0xff] %v64
            %v66 = vld [vmem:[%s56 + $0x20] sm:$0xff]
            %67 = vst [vmem:[%s57 + $0x20] sm:$0xff] %v66
            %v68 = vld [vmem:[%s56 + $0x28] sm:$0xff]
            %69 = vst [vmem:[%s57 + $0x28] sm:$0xff] %v68
          $region41: #{tpu_custom_call.1} parent=35 // loop_footer
            %s55 = sadd.s32 1, %s51
          $region42: #{tpu_custom_call.1} parent=35 // loop_footer_branch
            %50 = sbr.rel target = $region38
          $region43: #{tpu_custom_call.1} parent=35 // loop_exit
            _
          %s70 = sshllo.u32 0, %s45
          loop: start=0, step=1, limit=1
          $region44: #{tpu_custom_call.1} parent=35 // loop_pre_header
            _
          $region45: #{tpu_custom_call.1} parent=35 // loop_header
            %s72 = sphi 0, %s76
            %p73 = scmp.ge.s32.totalorder %s72, 1
            %s77 = sphi %s47, %s47
            %s78 = sphi %s49, %s49
          $region46: #{tpu_custom_call.1} parent=35 // loop_header_branch
            %75 = sbr.rel (%p73) target = $region50
          $region47: #{tpu_custom_call.1} parent=35 // loop_body
            %v79 = vld [vmem:[%s77] sm:%s70]
            %80 = vst [vmem:[%s78] sm:%s70] %v79
          $region48: #{tpu_custom_call.1} parent=35 // loop_footer
            %s76 = sadd.s32 1, %s72
          $region49: #{tpu_custom_call.1} parent=35 // loop_footer_branch
            %71 = sbr.rel target = $region45
          $region50: #{tpu_custom_call.1} parent=35 // loop_exit
            _
        $region36: #{tpu_custom_call.1} parent=20 // pred_fallthru
          _
      $region21: #{tpu_custom_call.1} parent=16 // pred_fallthru
        _
      // Predicated region
      $region22: #{tpu_custom_call.1} parent=16 // pred_check
        %p26 = pneg %p22
      $region23: #{tpu_custom_call.1} parent=16 // pred_check_branch
        %28 = sbr.rel (%p26) target = $region25
      $region24: #{tpu_custom_call.1} parent=16 // pred_region
        %s29 = sshllo.u32 0, 50
        loop: start=0, step=1, limit=1
        $region26: #{tpu_custom_call.1} parent=24 // loop_pre_header
          _
        $region27: #{tpu_custom_call.1} parent=24 // loop_header
          %s31 = sphi 0, %s35
          %p32 = scmp.ge.s32.totalorder %s31, 1
          %s36 = sphi %s3, %s3
          %s37 = sphi [#allocation2], [#allocation2]
        $region28: #{tpu_custom_call.1} parent=24 // loop_header_branch
          %34 = sbr.rel (%p32) target = $region32
        $region29: #{tpu_custom_call.1} parent=24 // loop_body
          %v38 = vld [vmem:[%s36] sm:%s29]
          %39 = vst [vmem:[%s37] sm:%s29] %v38
        $region30: #{tpu_custom_call.1} parent=24 // loop_footer
          %s35 = sadd.s32 1, %s31
        $region31: #{tpu_custom_call.1} parent=24 // loop_footer_branch
          %30 = sbr.rel target = $region27
        $region32: #{tpu_custom_call.1} parent=24 // loop_exit
          _
      $region25: #{tpu_custom_call.1} parent=16 // pred_fallthru
        _
      // Predicated region
      $region51: #{tpu_custom_call.1} parent=16 // pred_check
        _
      $region52: #{tpu_custom_call.1} parent=16 // pred_check_branch
        %83 = sbr.rel (0) target = $region54
      $region53: #{tpu_custom_call.1} parent=16 // pred_region
        %84 = vsyncadd [#allocation4], 800
      $region54: #{tpu_custom_call.1} parent=16 // pred_fallthru
        _
      %s85 = scalar_lea.sflag [#allocation4], 1
      %p87 = scmp.lt.u32.totalorder 50, 8
      %p88 = pneg %p87
      // Predicated region
      $region55: #{tpu_custom_call.1} parent=16 // pred_check
        _
      $region56: #{tpu_custom_call.1} parent=16 // pred_check_branch
        %90 = sbr.rel (%p87) target = $region58
      $region57: #{tpu_custom_call.1} parent=16 // pred_region
        %s105 = sand.u32 50, 7
        %p106 = scmp.eq.s32.totalorder %s105, 0
        %p107 = pneg %p106
        // Predicated region
        $region70: #{tpu_custom_call.1} parent=57 // pred_check
          _
        $region71: #{tpu_custom_call.1} parent=57 // pred_check_branch
          %109 = sbr.rel (%p106) target = $region73
        $region72: #{tpu_custom_call.1} parent=57 // pred_region
          %s110 = sand.u32 50, 7
          %s111 = ssub.s32 50, %s110
          %s112 = scalar_lea.vmem %s4, %s111
          %s113 = ssub.s32 50, %s110
          %s114 = scalar_lea.vmem [#allocation3], %s113
          loop: start=0, step=1, limit=1
          $region74: #{tpu_custom_call.1} parent=72 // loop_pre_header
            _
          $region75: #{tpu_custom_call.1} parent=72 // loop_header
            %s116 = sphi 0, %s120
            %p117 = scmp.ge.s32.totalorder %s116, 1
            %s121 = sphi %s4, %s4
            %s122 = sphi [#allocation3], [#allocation3]
          $region76: #{tpu_custom_call.1} parent=72 // loop_header_branch
            %119 = sbr.rel (%p117) target = $region80
          $region77: #{tpu_custom_call.1} parent=72 // loop_body
            %v123 = vld [vmem:[%s121] sm:$0xff]
            %124 = vst [vmem:[%s122] sm:$0xff] %v123
            %v125 = vld [vmem:[%s121 + $0x8] sm:$0xff]
            %126 = vst [vmem:[%s122 + $0x8] sm:$0xff] %v125
            %v127 = vld [vmem:[%s121 + $0x10] sm:$0xff]
            %128 = vst [vmem:[%s122 + $0x10] sm:$0xff] %v127
            %v129 = vld [vmem:[%s121 + $0x18] sm:$0xff]
            %130 = vst [vmem:[%s122 + $0x18] sm:$0xff] %v129
            %v131 = vld [vmem:[%s121 + $0x20] sm:$0xff]
            %132 = vst [vmem:[%s122 + $0x20] sm:$0xff] %v131
            %v133 = vld [vmem:[%s121 + $0x28] sm:$0xff]
            %134 = vst [vmem:[%s122 + $0x28] sm:$0xff] %v133
          $region78: #{tpu_custom_call.1} parent=72 // loop_footer
            %s120 = sadd.s32 1, %s116
          $region79: #{tpu_custom_call.1} parent=72 // loop_footer_branch
            %115 = sbr.rel target = $region75
          $region80: #{tpu_custom_call.1} parent=72 // loop_exit
            _
          %s135 = sshllo.u32 0, %s110
          loop: start=0, step=1, limit=1
          $region81: #{tpu_custom_call.1} parent=72 // loop_pre_header
            _
          $region82: #{tpu_custom_call.1} parent=72 // loop_header
            %s137 = sphi 0, %s141
            %p138 = scmp.ge.s32.totalorder %s137, 1
            %s142 = sphi %s112, %s112
            %s143 = sphi %s114, %s114
          $region83: #{tpu_custom_call.1} parent=72 // loop_header_branch
            %140 = sbr.rel (%p138) target = $region87
          $region84: #{tpu_custom_call.1} parent=72 // loop_body
            %v144 = vld [vmem:[%s142] sm:%s135]
            %145 = vst [vmem:[%s143] sm:%s135] %v144
          $region85: #{tpu_custom_call.1} parent=72 // loop_footer
            %s141 = sadd.s32 1, %s137
          $region86: #{tpu_custom_call.1} parent=72 // loop_footer_branch
            %136 = sbr.rel target = $region82
          $region87: #{tpu_custom_call.1} parent=72 // loop_exit
            _
        $region73: #{tpu_custom_call.1} parent=57 // pred_fallthru
          _
      $region58: #{tpu_custom_call.1} parent=16 // pred_fallthru
        _
      // Predicated region
      $region59: #{tpu_custom_call.1} parent=16 // pred_check
        %p91 = pneg %p87
      $region60: #{tpu_custom_call.1} parent=16 // pred_check_branch
        %93 = sbr.rel (%p91) target = $region62
      $region61: #{tpu_custom_call.1} parent=16 // pred_region
        %s94 = sshllo.u32 0, 50
        loop: start=0, step=1, limit=1
        $region63: #{tpu_custom_call.1} parent=61 // loop_pre_header
          _
        $region64: #{tpu_custom_call.1} parent=61 // loop_header
          %s96 = sphi 0, %s100
          %p97 = scmp.ge.s32.totalorder %s96, 1
          %s101 = sphi %s4, %s4
          %s102 = sphi [#allocation3], [#allocation3]
        $region65: #{tpu_custom_call.1} parent=61 // loop_header_branch
          %99 = sbr.rel (%p97) target = $region69
        $region66: #{tpu_custom_call.1} parent=61 // loop_body
          %v103 = vld [vmem:[%s101] sm:%s94]
          %104 = vst [vmem:[%s102] sm:%s94] %v103
        $region67: #{tpu_custom_call.1} parent=61 // loop_footer
          %s100 = sadd.s32 1, %s96
        $region68: #{tpu_custom_call.1} parent=61 // loop_footer_branch
          %95 = sbr.rel target = $region64
        $region69: #{tpu_custom_call.1} parent=61 // loop_exit
          _
      $region62: #{tpu_custom_call.1} parent=16 // pred_fallthru
        _
      // Predicated region
      $region88: #{tpu_custom_call.1} parent=16 // pred_check
        _
      $region89: #{tpu_custom_call.1} parent=16 // pred_check_branch
        %148 = sbr.rel (0) target = $region91
      $region90: #{tpu_custom_call.1} parent=16 // pred_region
        %149 = vsyncadd %s85, 800
      $region91: #{tpu_custom_call.1} parent=16 // pred_fallthru
        _
      %s150 = smul.u32 50, 1
      %s151 = sshll.u32 %s150, 4
      %152 = dma.done [#allocation4], %s151
      %s153 = sshll.u32 %s150, 4
      %154 = dma.done %s85, %s153
      %vm155 = vcmask 0
      %156 = vst.msk [vmem:[#allocation5] sm:$0x1] %vm155, 0.0
    $region17: #{tpu_custom_call.1} parent=1 // pred_fallthru
      _
    %v157 = vld [vmem:[%s0] sm:$0xff]
    %v158 = vld [vmem:[%s1] sm:$0xff]
    %v159 = vld [vmem:[%s2] sm:$0xff]
    %v160 = vlaneseq
    %v161 = vand.u32 %v160, 127
    %162 = vset.pattern.permute.xlu0 0
    %163 = vperm.xlu0 %162, %v157
    %v164 = vpop.permute.xlu0 %163
    %vm165 = vcmp.eq.s32.totalorder %v161, %v164
    %v166 = vsel %vm165, 1, 0
    %v167 = vcvt.s32.f32 %v166
    %168 = vset.pattern.permute.xlu0 0
    %169 = vperm.xlu0 %168, %v158
    %v170 = vpop.permute.xlu0 %169
    %vm171 = vcmp.eq.s32.totalorder %v161, %v170
    %v172 = vsel %vm171, 1, 0
    %v173 = vcvt.s32.f32 %v172
    %174 = vset.pattern.permute.xlu0 0
    %175 = vperm.xlu0 %174, %v159
    %v176 = vpop.permute.xlu0 %175
    %vm177 = vcmp.eq.s32.totalorder %v161, %v176
    %v178 = vsel %vm177, 1, 0
    %v179 = vcvt.s32.f32 %v178
    %v180 = vadd.f32 %v179, 0.0
    %181 = vset.pattern.permute.xlu0 1
    %182 = vperm.xlu0 %181, %v159
    %v183 = vpop.permute.xlu0 %182
    %vm184 = vcmp.eq.s32.totalorder %v161, %v183
    %v185 = vsel %vm184, 1, 0
    %v186 = vcvt.s32.f32 %v185
    %v187 = vadd.f32 %v180, %v186
    %188 = vset.pattern.permute.xlu0 2
    %189 = vperm.xlu0 %188, %v159
    %v190 = vpop.permute.xlu0 %189
    %vm191 = vcmp.eq.s32.totalorder %v161, %v190
    %v192 = vsel %vm191, 1, 0
    %v193 = vcvt.s32.f32 %v192
    %v194 = vadd.f32 %v187, %v193
    %195 = vset.pattern.permute.xlu0 3
    %196 = vperm.xlu0 %195, %v159
    %v197 = vpop.permute.xlu0 %196
    %vm198 = vcmp.eq.s32.totalorder %v161, %v197
    %v199 = vsel %vm198, 1, 0
    %v200 = vcvt.s32.f32 %v199
    %v201 = vadd.f32 %v194, %v200
    %202 = vset.pattern.permute.xlu0 4
    %203 = vperm.xlu0 %202, %v159
    %v204 = vpop.permute.xlu0 %203
    %vm205 = vcmp.eq.s32.totalorder %v161, %v204
    %v206 = vsel %vm205, 1, 0
    %v207 = vcvt.s32.f32 %v206
    %v208 = vadd.f32 %v201, %v207
    %v209 = vld [vmem:[#allocation2] sm:$0xff]
    %v210 = vld [vmem:[#allocation2 + $0x8] sm:$0xff]
    %v211 = vld [vmem:[#allocation2 + $0x10] sm:$0xff]
    %v212 = vld [vmem:[#allocation2 + $0x18] sm:$0xff]
    %v213 = vld [vmem:[#allocation2 + $0x20] sm:$0xff]
    %v214 = vld [vmem:[#allocation2 + $0x28] sm:$0xff]
    %v215 = vld [vmem:[#allocation2 + $0x30] sm:$0x3]
    %vm216 = vcmask 408576
    %v218 = vsel %vm216, %v167, 0
    %vm220 = vcmask 1041408
    %v222 = vsel %vm220, %v215, 0
    %224 = vmatprep.subr.mxu0 0.0
    %v225 = vand.u32 %v209, 4294901760
    %226 = vmatpush1.msra.mxu0 %v225
    %227 = vmatprep.subr.mxu0 0.0
    %v228 = vand.u32 %v210, 4294901760
    %229 = vmatpush1.msra.mxu0 %v228
    %230 = vmatprep.subr.mxu0 0.0
    %v231 = vand.u32 %v211, 4294901760
    %232 = vmatpush1.msra.mxu0 %v231
    %233 = vmatprep.subr.mxu0 0.0
    %v234 = vand.u32 %v212, 4294901760
    %235 = vmatpush1.msra.mxu0 %v234
    %236 = vmatprep.subr.mxu0 0.0
    %v237 = vand.u32 %v213, 4294901760
    %238 = vmatpush1.msra.mxu0 %v237
    %239 = vmatprep.subr.mxu0 0.0
    %v240 = vand.u32 %v214, 4294901760
    %241 = vmatpush1.msra.mxu0 %v240
    %242 = vmatprep.subr.mxu0 0.0
    %v243 = vand.u32 %v222, 4294901760
    %244 = vmatpush1.msra.mxu0 %v243
    %245 = vmatprep.subr.mxu0 0.0
    %246 = vmatpush1.msra.mxu0 0.0
    %247 = vmatprep.subr.mxu0 0.0
    %248 = vmatpush1.msra.mxu0 0.0
    %249 = vmatprep.subr.mxu0 0.0
    %250 = vmatpush1.msra.mxu0 0.0
    %251 = vmatprep.subr.mxu0 0.0
    %252 = vmatpush1.msra.mxu0 0.0
    %253 = vmatprep.subr.mxu0 0.0
    %254 = vmatpush1.msra.mxu0 0.0
    %255 = vmatprep.subr.mxu0 0.0
    %256 = vmatpush1.msra.mxu0 0.0
    %257 = vmatprep.subr.mxu0 0.0
    %258 = vmatpush1.msra.mxu0 0.0
    %259 = vmatprep.subr.mxu0 0.0
    %260 = vmatpush1.msra.mxu0 0.0
    %261 = vmatprep.subr.mxu0 0.0
    %262 = vmatpush1.msra.mxu0 0.0
    %263 = vmatprep.subr.mxu0 0.0
    %264 = vmatpush1.msra.mxu0 0.0
    %265 = vmatprep.subr.mxu0 0.0
    %266 = vmatpush1.msra.mxu0 0.0
    %267 = vmatprep.subr.mxu0 0.0
    %268 = vmatpush1.msra.mxu0 0.0
    %269 = vmatprep.subr.mxu0 0.0
    %270 = vmatpush1.msra.mxu0 0.0
    %271 = vmatprep.subr.mxu0 0.0
    %272 = vmatpush1.msra.mxu0 0.0
    %273 = vmatprep.subr.mxu0 0.0
    %274 = vmatpush1.msra.mxu0 0.0
    %275 = vmatprep.subr.mxu0 0.0
    %276 = vmatpush1.msra.mxu0 0.0
    %277 = vmatprep.subr.mxu0 0.0
    %278 = vmatpush1.msra.mxu0 0.0
    %279 = vmatprep.subr.mxu0 0.0
    %280 = vmatpush1.msra.mxu0 0.0
    %281 = vmatprep.subr.mxu0 0.0
    %282 = vmatpush1.msra.mxu0 0.0
    %283 = vmatprep.subr.mxu0 0.0
    %284 = vmatpush1.msra.mxu0 0.0
    %285 = vmatprep.subr.mxu0 0.0
    %286 = vmatpush1.msra.mxu0 0.0
    %287 = vmatprep.subr.mxu0 0.0
    %288 = vmatpush1.msra.mxu0 0.0
    %289 = vmatprep.subr.mxu0 0.0
    %290 = vmatpush1.msra.mxu0 0.0
    %291 = vmatprep.subr.mxu0 0.0
    %292 = vmatpush1.msra.mxu0 0.0
    %293 = vmatprep.subr.mxu0 0.0
    %294 = vmatpush1.msra.mxu0 0.0
    %295 = vmatprep.mubr.f32.mxu0 0.0
    %v296 = vand.u32 %v218, 4294901760
    %v297 = vsub.f32 %v218, %v296
    %v298 = vand.u32 %v297, 4294901760
    %v299 = vsub.f32 %v297, %v298
    %v300 = vand.u32 %v299, 4294901760
    %301 = vmatmul.mubr.f32.gmra.mrb[0].mxu0 %v300
    %v302 = vpop.f32.mrb[0].mxu0
    %v303 = vadd.f32 0.0, %v302
    %v304 = vpop.f32.mrb[0].mxu0
    %305 = vdwg.mxu0
    %306 = vmatprep.subr.mxu0 0.0
    %v307 = vand.u32 %v209, 4294901760
    %v308 = vsub.f32 %v209, %v307
    %v309 = vand.u32 %v308, 4294901760
    %v310 = vsub.f32 %v308, %v309
    %v311 = vand.u32 %v310, 4294901760
    %312 = vmatpush1.msra.mxu0 %v311
    %313 = vmatprep.subr.mxu0 0.0
    %v314 = vand.u32 %v210, 4294901760
    %v315 = vsub.f32 %v210, %v314
    %v316 = vand.u32 %v315, 4294901760
    %v317 = vsub.f32 %v315, %v316
    %v318 = vand.u32 %v317, 4294901760
    %319 = vmatpush1.msra.mxu0 %v318
    %320 = vmatprep.subr.mxu0 0.0
    %v321 = vand.u32 %v211, 4294901760
    %v322 = vsub.f32 %v211, %v321
    %v323 = vand.u32 %v322, 4294901760
    %v324 = vsub.f32 %v322, %v323
    %v325 = vand.u32 %v324, 4294901760
    %326 = vmatpush1.msra.mxu0 %v325
    %327 = vmatprep.subr.mxu0 0.0
    %v328 = vand.u32 %v212, 4294901760
    %v329 = vsub.f32 %v212, %v328
    %v330 = vand.u32 %v329, 4294901760
    %v331 = vsub.f32 %v329, %v330
    %v332 = vand.u32 %v331, 4294901760
    %333 = vmatpush1.msra.mxu0 %v332
    %334 = vmatprep.subr.mxu0 0.0
    %v335 = vand.u32 %v213, 4294901760
    %v336 = vsub.f32 %v213, %v335
    %v337 = vand.u32 %v336, 4294901760
    %v338 = vsub.f32 %v336, %v337
    %v339 = vand.u32 %v338, 4294901760
    %340 = vmatpush1.msra.mxu0 %v339
    %341 = vmatprep.subr.mxu0 0.0
    %v342 = vand.u32 %v214, 4294901760
    %v343 = vsub.f32 %v214, %v342
    %v344 = vand.u32 %v343, 4294901760
    %v345 = vsub.f32 %v343, %v344
    %v346 = vand.u32 %v345, 4294901760
    %347 = vmatpush1.msra.mxu0 %v346
    %348 = vmatprep.subr.mxu0 0.0
    %v349 = vand.u32 %v222, 4294901760
    %v350 = vsub.f32 %v222, %v349
    %v351 = vand.u32 %v350, 4294901760
    %v352 = vsub.f32 %v350, %v351
    %v353 = vand.u32 %v352, 4294901760
    %354 = vmatpush1.msra.mxu0 %v353
    %355 = vmatprep.subr.mxu0 0.0
    %356 = vmatpush1.msra.mxu0 0.0
    %357 = vmatprep.subr.mxu0 0.0
    %358 = vmatpush1.msra.mxu0 0.0
    %359 = vmatprep.subr.mxu0 0.0
    %360 = vmatpush1.msra.mxu0 0.0
    %361 = vmatprep.subr.mxu0 0.0
    %362 = vmatpush1.msra.mxu0 0.0
    %363 = vmatprep.subr.mxu0 0.0
    %364 = vmatpush1.msra.mxu0 0.0
    %365 = vmatprep.subr.mxu0 0.0
    %366 = vmatpush1.msra.mxu0 0.0
    %367 = vmatprep.subr.mxu0 0.0
    %368 = vmatpush1.msra.mxu0 0.0
    %369 = vmatprep.subr.mxu0 0.0
    %370 = vmatpush1.msra.mxu0 0.0
    %371 = vmatprep.subr.mxu0 0.0
    %372 = vmatpush1.msra.mxu0 0.0
    %373 = vmatprep.subr.mxu0 0.0
    %374 = vmatpush1.msra.mxu0 0.0
    %375 = vmatprep.subr.mxu0 0.0
    %376 = vmatpush1.msra.mxu0 0.0
    %377 = vmatprep.subr.mxu0 0.0
    %378 = vmatpush1.msra.mxu0 0.0
    %379 = vmatprep.subr.mxu0 0.0
    %380 = vmatpush1.msra.mxu0 0.0
    %381 = vmatprep.subr.mxu0 0.0
    %382 = vmatpush1.msra.mxu0 0.0
    %383 = vmatprep.subr.mxu0 0.0
    %384 = vmatpush1.msra.mxu0 0.0
    %385 = vmatprep.subr.mxu0 0.0
    %386 = vmatpush1.msra.mxu0 0.0
    %387 = vmatprep.subr.mxu0 0.0
    %388 = vmatpush1.msra.mxu0 0.0
    %389 = vmatprep.subr.mxu0 0.0
    %390 = vmatpush1.msra.mxu0 0.0
    %391 = vmatprep.subr.mxu0 0.0
    %392 = vmatpush1.msra.mxu0 0.0
    %393 = vmatprep.subr.mxu0 0.0
    %394 = vmatpush1.msra.mxu0 0.0
    %395 = vmatprep.subr.mxu0 0.0
    %396 = vmatpush1.msra.mxu0 0.0
    %397 = vmatprep.subr.mxu0 0.0
    %398 = vmatpush1.msra.mxu0 0.0
    %399 = vmatprep.subr.mxu0 0.0
    %400 = vmatpush1.msra.mxu0 0.0
    %401 = vmatprep.subr.mxu0 0.0
    %402 = vmatpush1.msra.mxu0 0.0
    %403 = vmatprep.subr.mxu0 0.0
    %404 = vmatpush1.msra.mxu0 0.0
    %405 = vmatprep.mubr.f32.mxu0 0.0
    %v406 = vand.u32 %v218, 4294901760
    %407 = vmatmul.mubr.f32.gmra.mrb[0].mxu0 %v406
    %v408 = vpop.f32.mrb[0].mxu0
    %v409 = vadd.f32 %v303, %v408
    %v410 = vpop.f32.mrb[0].mxu0
    %411 = vdwg.mxu0
    %412 = vmatprep.subr.mxu0 0.0
    %v413 = vand.u32 %v209, 4294901760
    %v414 = vsub.f32 %v209, %v413
    %415 = vmatpush1.msra.mxu0 %v414
    %416 = vmatprep.subr.mxu0 0.0
    %v417 = vand.u32 %v210, 4294901760
    %v418 = vsub.f32 %v210, %v417
    %419 = vmatpush1.msra.mxu0 %v418
    %420 = vmatprep.subr.mxu0 0.0
    %v421 = vand.u32 %v211, 4294901760
    %v422 = vsub.f32 %v211, %v421
    %423 = vmatpush1.msra.mxu0 %v422
    %424 = vmatprep.subr.mxu0 0.0
    %v425 = vand.u32 %v212, 4294901760
    %v426 = vsub.f32 %v212, %v425
    %427 = vmatpush1.msra.mxu0 %v426
    %428 = vmatprep.subr.mxu0 0.0
    %v429 = vand.u32 %v213, 4294901760
    %v430 = vsub.f32 %v213, %v429
    %431 = vmatpush1.msra.mxu0 %v430
    %432 = vmatprep.subr.mxu0 0.0
    %v433 = vand.u32 %v214, 4294901760
    %v434 = vsub.f32 %v214, %v433
    %435 = vmatpush1.msra.mxu0 %v434
    %436 = vmatprep.subr.mxu0 0.0
    %v437 = vand.u32 %v222, 4294901760
    %v438 = vsub.f32 %v222, %v437
    %439 = vmatpush1.msra.mxu0 %v438
    %440 = vmatprep.subr.mxu0 0.0
    %441 = vmatpush1.msra.mxu0 0.0
    %442 = vmatprep.subr.mxu0 0.0
    %443 = vmatpush1.msra.mxu0 0.0
    %444 = vmatprep.subr.mxu0 0.0
    %445 = vmatpush1.msra.mxu0 0.0
    %446 = vmatprep.subr.mxu0 0.0
    %447 = vmatpush1.msra.mxu0 0.0
    %448 = vmatprep.subr.mxu0 0.0
    %449 = vmatpush1.msra.mxu0 0.0
    %450 = vmatprep.subr.mxu0 0.0
    %451 = vmatpush1.msra.mxu0 0.0
    %452 = vmatprep.subr.mxu0 0.0
    %453 = vmatpush1.msra.mxu0 0.0
    %454 = vmatprep.subr.mxu0 0.0
    %455 = vmatpush1.msra.mxu0 0.0
    %456 = vmatprep.subr.mxu0 0.0
    %457 = vmatpush1.msra.mxu0 0.0
    %458 = vmatprep.subr.mxu0 0.0
    %459 = vmatpush1.msra.mxu0 0.0
    %460 = vmatprep.subr.mxu0 0.0
    %461 = vmatpush1.msra.mxu0 0.0
    %462 = vmatprep.subr.mxu0 0.0
    %463 = vmatpush1.msra.mxu0 0.0
    %464 = vmatprep.subr.mxu0 0.0
    %465 = vmatpush1.msra.mxu0 0.0
    %466 = vmatprep.subr.mxu0 0.0
    %467 = vmatpush1.msra.mxu0 0.0
    %468 = vmatprep.subr.mxu0 0.0
    %469 = vmatpush1.msra.mxu0 0.0
    %470 = vmatprep.subr.mxu0 0.0
    %471 = vmatpush1.msra.mxu0 0.0
    %472 = vmatprep.subr.mxu0 0.0
    %473 = vmatpush1.msra.mxu0 0.0
    %474 = vmatprep.subr.mxu0 0.0
    %475 = vmatpush1.msra.mxu0 0.0
    %476 = vmatprep.subr.mxu0 0.0
    %477 = vmatpush1.msra.mxu0 0.0
    %478 = vmatprep.subr.mxu0 0.0
    %479 = vmatpush1.msra.mxu0 0.0
    %480 = vmatprep.subr.mxu0 0.0
    %481 = vmatpush1.msra.mxu0 0.0
    %482 = vmatprep.subr.mxu0 0.0
    %483 = vmatpush1.msra.mxu0 0.0
    %484 = vmatprep.subr.mxu0 0.0
    %485 = vmatpush1.msra.mxu0 0.0
    %486 = vmatprep.subr.mxu0 0.0
    %487 = vmatpush1.msra.mxu0 0.0
    %488 = vmatprep.subr.mxu0 0.0
    %489 = vmatpush1.msra.mxu0 0.0
    %490 = vmatprep.mubr.f32.mxu0 0.0
    %v491 = vand.u32 %v218, 4294901760
    %v492 = vsub.f32 %v218, %v491
    %493 = vmatmul.mubr.f32.gmra.mrb[0].mxu0 %v492
    %v494 = vpop.f32.mrb[0].mxu0
    %v495 = vadd.f32 %v409, %v494
    %v496 = vpop.f32.mrb[0].mxu0
    %497 = vdwg.mxu0
    %498 = vmatprep.subr.mxu0 0.0
    %v499 = vand.u32 %v209, 4294901760
    %500 = vmatpush1.msra.mxu0 %v499
    %501 = vmatprep.subr.mxu0 0.0
    %v502 = vand.u32 %v210, 4294901760
    %503 = vmatpush1.msra.mxu0 %v502
    %504 = vmatprep.subr.mxu0 0.0
    %v505 = vand.u32 %v211, 4294901760
    %506 = vmatpush1.msra.mxu0 %v505
    %507 = vmatprep.subr.mxu0 0.0
    %v508 = vand.u32 %v212, 4294901760
    %509 = vmatpush1.msra.mxu0 %v508
    %510 = vmatprep.subr.mxu0 0.0
    %v511 = vand.u32 %v213, 4294901760
    %512 = vmatpush1.msra.mxu0 %v511
    %513 = vmatprep.subr.mxu0 0.0
    %v514 = vand.u32 %v214, 4294901760
    %515 = vmatpush1.msra.mxu0 %v514
    %516 = vmatprep.subr.mxu0 0.0
    %v517 = vand.u32 %v222, 4294901760
    %518 = vmatpush1.msra.mxu0 %v517
    %519 = vmatprep.subr.mxu0 0.0
    %520 = vmatpush1.msra.mxu0 0.0
    %521 = vmatprep.subr.mxu0 0.0
    %522 = vmatpush1.msra.mxu0 0.0
    %523 = vmatprep.subr.mxu0 0.0
    %524 = vmatpush1.msra.mxu0 0.0
    %525 = vmatprep.subr.mxu0 0.0
    %526 = vmatpush1.msra.mxu0 0.0
    %527 = vmatprep.subr.mxu0 0.0
    %528 = vmatpush1.msra.mxu0 0.0
    %529 = vmatprep.subr.mxu0 0.0
    %530 = vmatpush1.msra.mxu0 0.0
    %531 = vmatprep.subr.mxu0 0.0
    %532 = vmatpush1.msra.mxu0 0.0
    %533 = vmatprep.subr.mxu0 0.0
    %534 = vmatpush1.msra.mxu0 0.0
    %535 = vmatprep.subr.mxu0 0.0
    %536 = vmatpush1.msra.mxu0 0.0
    %537 = vmatprep.subr.mxu0 0.0
    %538 = vmatpush1.msra.mxu0 0.0
    %539 = vmatprep.subr.mxu0 0.0
    %540 = vmatpush1.msra.mxu0 0.0
    %541 = vmatprep.subr.mxu0 0.0
    %542 = vmatpush1.msra.mxu0 0.0
    %543 = vmatprep.subr.mxu0 0.0
    %544 = vmatpush1.msra.mxu0 0.0
    %545 = vmatprep.subr.mxu0 0.0
    %546 = vmatpush1.msra.mxu0 0.0
    %547 = vmatprep.subr.mxu0 0.0
    %548 = vmatpush1.msra.mxu0 0.0
    %549 = vmatprep.subr.mxu0 0.0
    %550 = vmatpush1.msra.mxu0 0.0
    %551 = vmatprep.subr.mxu0 0.0
    %552 = vmatpush1.msra.mxu0 0.0
    %553 = vmatprep.subr.mxu0 0.0
    %554 = vmatpush1.msra.mxu0 0.0
    %555 = vmatprep.subr.mxu0 0.0
    %556 = vmatpush1.msra.mxu0 0.0
    %557 = vmatprep.subr.mxu0 0.0
    %558 = vmatpush1.msra.mxu0 0.0
    %559 = vmatprep.subr.mxu0 0.0
    %560 = vmatpush1.msra.mxu0 0.0
    %561 = vmatprep.subr.mxu0 0.0
    %562 = vmatpush1.msra.mxu0 0.0
    %563 = vmatprep.subr.mxu0 0.0
    %564 = vmatpush1.msra.mxu0 0.0
    %565 = vmatprep.subr.mxu0 0.0
    %566 = vmatpush1.msra.mxu0 0.0
    %567 = vmatprep.subr.mxu0 0.0
    %568 = vmatpush1.msra.mxu0 0.0
    %569 = vmatprep.mubr.f32.mxu0 0.0
    %v570 = vand.u32 %v218, 4294901760
    %v571 = vsub.f32 %v218, %v570
    %v572 = vand.u32 %v571, 4294901760
    %573 = vmatmul.mubr.f32.gmra.mrb[0].mxu0 %v572
    %v574 = vpop.f32.mrb[0].mxu0
    %v575 = vadd.f32 %v495, %v574
    %v576 = vpop.f32.mrb[0].mxu0
    %577 = vdwg.mxu0
    %578 = vmatprep.subr.mxu0 0.0
    %v579 = vand.u32 %v209, 4294901760
    %v580 = vsub.f32 %v209, %v579
    %v581 = vand.u32 %v580, 4294901760
    %582 = vmatpush1.msra.mxu0 %v581
    %583 = vmatprep.subr.mxu0 0.0
    %v584 = vand.u32 %v210, 4294901760
    %v585 = vsub.f32 %v210, %v584
    %v586 = vand.u32 %v585, 4294901760
    %587 = vmatpush1.msra.mxu0 %v586
    %588 = vmatprep.subr.mxu0 0.0
    %v589 = vand.u32 %v211, 4294901760
    %v590 = vsub.f32 %v211, %v589
    %v591 = vand.u32 %v590, 4294901760
    %592 = vmatpush1.msra.mxu0 %v591
    %593 = vmatprep.subr.mxu0 0.0
    %v594 = vand.u32 %v212, 4294901760
    %v595 = vsub.f32 %v212, %v594
    %v596 = vand.u32 %v595, 4294901760
    %597 = vmatpush1.msra.mxu0 %v596
    %598 = vmatprep.subr.mxu0 0.0
    %v599 = vand.u32 %v213, 4294901760
    %v600 = vsub.f32 %v213, %v599
    %v601 = vand.u32 %v600, 4294901760
    %602 = vmatpush1.msra.mxu0 %v601
    %603 = vmatprep.subr.mxu0 0.0
    %v604 = vand.u32 %v214, 4294901760
    %v605 = vsub.f32 %v214, %v604
    %v606 = vand.u32 %v605, 4294901760
    %607 = vmatpush1.msra.mxu0 %v606
    %608 = vmatprep.subr.mxu0 0.0
    %v609 = vand.u32 %v222, 4294901760
    %v610 = vsub.f32 %v222, %v609
    %v611 = vand.u32 %v610, 4294901760
    %612 = vmatpush1.msra.mxu0 %v611
    %613 = vmatprep.subr.mxu0 0.0
    %614 = vmatpush1.msra.mxu0 0.0
    %615 = vmatprep.subr.mxu0 0.0
    %616 = vmatpush1.msra.mxu0 0.0
    %617 = vmatprep.subr.mxu0 0.0
    %618 = vmatpush1.msra.mxu0 0.0
    %619 = vmatprep.subr.mxu0 0.0
    %620 = vmatpush1.msra.mxu0 0.0
    %621 = vmatprep.subr.mxu0 0.0
    %622 = vmatpush1.msra.mxu0 0.0
    %623 = vmatprep.subr.mxu0 0.0
    %624 = vmatpush1.msra.mxu0 0.0
    %625 = vmatprep.subr.mxu0 0.0
    %626 = vmatpush1.msra.mxu0 0.0
    %627 = vmatprep.subr.mxu0 0.0
    %628 = vmatpush1.msra.mxu0 0.0
    %629 = vmatprep.subr.mxu0 0.0
    %630 = vmatpush1.msra.mxu0 0.0
    %631 = vmatprep.subr.mxu0 0.0
    %632 = vmatpush1.msra.mxu0 0.0
    %633 = vmatprep.subr.mxu0 0.0
    %634 = vmatpush1.msra.mxu0 0.0
    %635 = vmatprep.subr.mxu0 0.0
    %636 = vmatpush1.msra.mxu0 0.0
    %637 = vmatprep.subr.mxu0 0.0
    %638 = vmatpush1.msra.mxu0 0.0
    %639 = vmatprep.subr.mxu0 0.0
    %640 = vmatpush1.msra.mxu0 0.0
    %641 = vmatprep.subr.mxu0 0.0
    %642 = vmatpush1.msra.mxu0 0.0
    %643 = vmatprep.subr.mxu0 0.0
    %644 = vmatpush1.msra.mxu0 0.0
    %645 = vmatprep.subr.mxu0 0.0
    %646 = vmatpush1.msra.mxu0 0.0
    %647 = vmatprep.subr.mxu0 0.0
    %648 = vmatpush1.msra.mxu0 0.0
    %649 = vmatprep.subr.mxu0 0.0
    %650 = vmatpush1.msra.mxu0 0.0
    %651 = vmatprep.subr.mxu0 0.0
    %652 = vmatpush1.msra.mxu0 0.0
    %653 = vmatprep.subr.mxu0 0.0
    %654 = vmatpush1.msra.mxu0 0.0
    %655 = vmatprep.subr.mxu0 0.0
    %656 = vmatpush1.msra.mxu0 0.0
    %657 = vmatprep.subr.mxu0 0.0
    %658 = vmatpush1.msra.mxu0 0.0
    %659 = vmatprep.subr.mxu0 0.0
    %660 = vmatpush1.msra.mxu0 0.0
    %661 = vmatprep.subr.mxu0 0.0
    %662 = vmatpush1.msra.mxu0 0.0
    %663 = vmatprep.mubr.f32.mxu0 0.0
    %v664 = vand.u32 %v218, 4294901760
    %665 = vmatmul.mubr.f32.gmra.mrb[0].mxu0 %v664
    %v666 = vpop.f32.mrb[0].mxu0
    %v667 = vadd.f32 %v575, %v666
    %v668 = vpop.f32.mrb[0].mxu0
    %669 = vdwg.mxu0
    %670 = vmatprep.subr.mxu0 0.0
    %v671 = vand.u32 %v209, 4294901760
    %672 = vmatpush1.msra.mxu0 %v671
    %673 = vmatprep.subr.mxu0 0.0
    %v674 = vand.u32 %v210, 4294901760
    %675 = vmatpush1.msra.mxu0 %v674
    %676 = vmatprep.subr.mxu0 0.0
    %v677 = vand.u32 %v211, 4294901760
    %678 = vmatpush1.msra.mxu0 %v677
    %679 = vmatprep.subr.mxu0 0.0
    %v680 = vand.u32 %v212, 4294901760
    %681 = vmatpush1.msra.mxu0 %v680
    %682 = vmatprep.subr.mxu0 0.0
    %v683 = vand.u32 %v213, 4294901760
    %684 = vmatpush1.msra.mxu0 %v683
    %685 = vmatprep.subr.mxu0 0.0
    %v686 = vand.u32 %v214, 4294901760
    %687 = vmatpush1.msra.mxu0 %v686
    %688 = vmatprep.subr.mxu0 0.0
    %v689 = vand.u32 %v222, 4294901760
    %690 = vmatpush1.msra.mxu0 %v689
    %691 = vmatprep.subr.mxu0 0.0
    %692 = vmatpush1.msra.mxu0 0.0
    %693 = vmatprep.subr.mxu0 0.0
    %694 = vmatpush1.msra.mxu0 0.0
    %695 = vmatprep.subr.mxu0 0.0
    %696 = vmatpush1.msra.mxu0 0.0
    %697 = vmatprep.subr.mxu0 0.0
    %698 = vmatpush1.msra.mxu0 0.0
    %699 = vmatprep.subr.mxu0 0.0
    %700 = vmatpush1.msra.mxu0 0.0
    %701 = vmatprep.subr.mxu0 0.0
    %702 = vmatpush1.msra.mxu0 0.0
    %703 = vmatprep.subr.mxu0 0.0
    %704 = vmatpush1.msra.mxu0 0.0
    %705 = vmatprep.subr.mxu0 0.0
    %706 = vmatpush1.msra.mxu0 0.0
    %707 = vmatprep.subr.mxu0 0.0
    %708 = vmatpush1.msra.mxu0 0.0
    %709 = vmatprep.subr.mxu0 0.0
    %710 = vmatpush1.msra.mxu0 0.0
    %711 = vmatprep.subr.mxu0 0.0
    %712 = vmatpush1.msra.mxu0 0.0
    %713 = vmatprep.subr.mxu0 0.0
    %714 = vmatpush1.msra.mxu0 0.0
    %715 = vmatprep.subr.mxu0 0.0
    %716 = vmatpush1.msra.mxu0 0.0
    %717 = vmatprep.subr.mxu0 0.0
    %718 = vmatpush1.msra.mxu0 0.0
    %719 = vmatprep.subr.mxu0 0.0
    %720 = vmatpush1.msra.mxu0 0.0
    %721 = vmatprep.subr.mxu0 0.0
    %722 = vmatpush1.msra.mxu0 0.0
    %723 = vmatprep.subr.mxu0 0.0
    %724 = vmatpush1.msra.mxu0 0.0
    %725 = vmatprep.subr.mxu0 0.0
    %726 = vmatpush1.msra.mxu0 0.0
    %727 = vmatprep.subr.mxu0 0.0
    %728 = vmatpush1.msra.mxu0 0.0
    %729 = vmatprep.subr.mxu0 0.0
    %730 = vmatpush1.msra.mxu0 0.0
    %731 = vmatprep.subr.mxu0 0.0
    %732 = vmatpush1.msra.mxu0 0.0
    %733 = vmatprep.subr.mxu0 0.0
    %734 = vmatpush1.msra.mxu0 0.0
    %735 = vmatprep.subr.mxu0 0.0
    %736 = vmatpush1.msra.mxu0 0.0
    %737 = vmatprep.subr.mxu0 0.0
    %738 = vmatpush1.msra.mxu0 0.0
    %739 = vmatprep.subr.mxu0 0.0
    %740 = vmatpush1.msra.mxu0 0.0
    %741 = vmatprep.mubr.f32.mxu0 0.0
    %v742 = vand.u32 %v218, 4294901760
    %743 = vmatmul.mubr.f32.gmra.mrb[0].mxu0 %v742
    %v744 = vpop.f32.mrb[0].mxu0
    %v745 = vadd.f32 %v667, %v744
    %v746 = vpop.f32.mrb[0].mxu0
    %747 = vdwg.mxu0
    %v748 = vld [vmem:[#allocation3] sm:$0xff]
    %v749 = vld [vmem:[#allocation3 + $0x8] sm:$0xff]
    %v750 = vld [vmem:[#allocation3 + $0x10] sm:$0xff]
    %v751 = vld [vmem:[#allocation3 + $0x18] sm:$0xff]
    %v752 = vld [vmem:[#allocation3 + $0x20] sm:$0xff]
    %v753 = vld [vmem:[#allocation3 + $0x28] sm:$0xff]
    %v754 = vld [vmem:[#allocation3 + $0x30] sm:$0x3]
    %v756 = vsel %vm216, %v173, 0
    %v759 = vsel %vm216, %v208, 0
    %v762 = vsel %vm220, %v754, 0
    %764 = vmatprep.subr.mxu0 0.0
    %v765 = vand.u32 %v748, 4294901760
    %766 = vmatpush1.msra.mxu0 %v765
    %767 = vmatprep.subr.mxu0 0.0
    %v768 = vand.u32 %v749, 4294901760
    %769 = vmatpush1.msra.mxu0 %v768
    %770 = vmatprep.subr.mxu0 0.0
    %v771 = vand.u32 %v750, 4294901760
    %772 = vmatpush1.msra.mxu0 %v771
    %773 = vmatprep.subr.mxu0 0.0
    %v774 = vand.u32 %v751, 4294901760
    %775 = vmatpush1.msra.mxu0 %v774
    %776 = vmatprep.subr.mxu0 0.0
    %v777 = vand.u32 %v752, 4294901760
    %778 = vmatpush1.msra.mxu0 %v777
    %779 = vmatprep.subr.mxu0 0.0
    %v780 = vand.u32 %v753, 4294901760
    %781 = vmatpush1.msra.mxu0 %v780
    %782 = vmatprep.subr.mxu0 0.0
    %v783 = vand.u32 %v762, 4294901760
    %784 = vmatpush1.msra.mxu0 %v783
    %785 = vmatprep.subr.mxu0 0.0
    %786 = vmatpush1.msra.mxu0 0.0
    %787 = vmatprep.subr.mxu0 0.0
    %788 = vmatpush1.msra.mxu0 0.0
    %789 = vmatprep.subr.mxu0 0.0
    %790 = vmatpush1.msra.mxu0 0.0
    %791 = vmatprep.subr.mxu0 0.0
    %792 = vmatpush1.msra.mxu0 0.0
    %793 = vmatprep.subr.mxu0 0.0
    %794 = vmatpush1.msra.mxu0 0.0
    %795 = vmatprep.subr.mxu0 0.0
    %796 = vmatpush1.msra.mxu0 0.0
    %797 = vmatprep.subr.mxu0 0.0
    %798 = vmatpush1.msra.mxu0 0.0
    %799 = vmatprep.subr.mxu0 0.0
    %800 = vmatpush1.msra.mxu0 0.0
    %801 = vmatprep.subr.mxu0 0.0
    %802 = vmatpush1.msra.mxu0 0.0
    %803 = vmatprep.subr.mxu0 0.0
    %804 = vmatpush1.msra.mxu0 0.0
    %805 = vmatprep.subr.mxu0 0.0
    %806 = vmatpush1.msra.mxu0 0.0
    %807 = vmatprep.subr.mxu0 0.0
    %808 = vmatpush1.msra.mxu0 0.0
    %809 = vmatprep.subr.mxu0 0.0
    %810 = vmatpush1.msra.mxu0 0.0
    %811 = vmatprep.subr.mxu0 0.0
    %812 = vmatpush1.msra.mxu0 0.0
    %813 = vmatprep.subr.mxu0 0.0
    %814 = vmatpush1.msra.mxu0 0.0
    %815 = vmatprep.subr.mxu0 0.0
    %816 = vmatpush1.msra.mxu0 0.0
    %817 = vmatprep.subr.mxu0 0.0
    %818 = vmatpush1.msra.mxu0 0.0
    %819 = vmatprep.subr.mxu0 0.0
    %820 = vmatpush1.msra.mxu0 0.0
    %821 = vmatprep.subr.mxu0 0.0
    %822 = vmatpush1.msra.mxu0 0.0
    %823 = vmatprep.subr.mxu0 0.0
    %824 = vmatpush1.msra.mxu0 0.0
    %825 = vmatprep.subr.mxu0 0.0
    %826 = vmatpush1.msra.mxu0 0.0
    %827 = vmatprep.subr.mxu0 0.0
    %828 = vmatpush1.msra.mxu0 0.0
    %829 = vmatprep.subr.mxu0 0.0
    %830 = vmatpush1.msra.mxu0 0.0
    %831 = vmatprep.subr.mxu0 0.0
    %832 = vmatpush1.msra.mxu0 0.0
    %833 = vmatprep.subr.mxu0 0.0
    %834 = vmatpush1.msra.mxu0 0.0
    %835 = vmatprep.mubr.f32.mxu0 0.0
    %v836 = vand.u32 %v756, 4294901760
    %v837 = vsub.f32 %v756, %v836
    %v838 = vand.u32 %v837, 4294901760
    %v839 = vsub.f32 %v837, %v838
    %v840 = vand.u32 %v839, 4294901760
    %841 = vmatmul.mubr.f32.gmra.mrb[0].mxu0 %v840
    %v842 = vpop.f32.mrb[0].mxu0
    %v843 = vadd.f32 0.0, %v842
    %v844 = vpop.f32.mrb[0].mxu0
    %845 = vmatprep.mubr.f32.mxu0 0.0
    %v846 = vand.u32 %v759, 4294901760
    %v847 = vsub.f32 %v759, %v846
    %v848 = vand.u32 %v847, 4294901760
    %v849 = vsub.f32 %v847, %v848
    %v850 = vand.u32 %v849, 4294901760
    %851 = vmatmul.mubr.f32.gmra.mrb[0].mxu0 %v850
    %v852 = vpop.f32.mrb[0].mxu0
    %v853 = vadd.f32 0.0, %v852
    %v854 = vpop.f32.mrb[0].mxu0
    %855 = vdwg.mxu0
    %856 = vmatprep.subr.mxu0 0.0
    %v857 = vand.u32 %v748, 4294901760
    %v858 = vsub.f32 %v748, %v857
    %v859 = vand.u32 %v858, 4294901760
    %v860 = vsub.f32 %v858, %v859
    %v861 = vand.u32 %v860, 4294901760
    %862 = vmatpush1.msra.mxu0 %v861
    %863 = vmatprep.subr.mxu0 0.0
    %v864 = vand.u32 %v749, 4294901760
    %v865 = vsub.f32 %v749, %v864
    %v866 = vand.u32 %v865, 4294901760
    %v867 = vsub.f32 %v865, %v866
    %v868 = vand.u32 %v867, 4294901760
    %869 = vmatpush1.msra.mxu0 %v868
    %870 = vmatprep.subr.mxu0 0.0
    %v871 = vand.u32 %v750, 4294901760
    %v872 = vsub.f32 %v750, %v871
    %v873 = vand.u32 %v872, 4294901760
    %v874 = vsub.f32 %v872, %v873
    %v875 = vand.u32 %v874, 4294901760
    %876 = vmatpush1.msra.mxu0 %v875
    %877 = vmatprep.subr.mxu0 0.0
    %v878 = vand.u32 %v751, 4294901760
    %v879 = vsub.f32 %v751, %v878
    %v880 = vand.u32 %v879, 4294901760
    %v881 = vsub.f32 %v879, %v880
    %v882 = vand.u32 %v881, 4294901760
    %883 = vmatpush1.msra.mxu0 %v882
    %884 = vmatprep.subr.mxu0 0.0
    %v885 = vand.u32 %v752, 4294901760
    %v886 = vsub.f32 %v752, %v885
    %v887 = vand.u32 %v886, 4294901760
    %v888 = vsub.f32 %v886, %v887
    %v889 = vand.u32 %v888, 4294901760
    %890 = vmatpush1.msra.mxu0 %v889
    %891 = vmatprep.subr.mxu0 0.0
    %v892 = vand.u32 %v753, 4294901760
    %v893 = vsub.f32 %v753, %v892
    %v894 = vand.u32 %v893, 4294901760
    %v895 = vsub.f32 %v893, %v894
    %v896 = vand.u32 %v895, 4294901760
    %897 = vmatpush1.msra.mxu0 %v896
    %898 = vmatprep.subr.mxu0 0.0
    %v899 = vand.u32 %v762, 4294901760
    %v900 = vsub.f32 %v762, %v899
    %v901 = vand.u32 %v900, 4294901760
    %v902 = vsub.f32 %v900, %v901
    %v903 = vand.u32 %v902, 4294901760
    %904 = vmatpush1.msra.mxu0 %v903
    %905 = vmatprep.subr.mxu0 0.0
    %906 = vmatpush1.msra.mxu0 0.0
    %907 = vmatprep.subr.mxu0 0.0
    %908 = vmatpush1.msra.mxu0 0.0
    %909 = vmatprep.subr.mxu0 0.0
    %910 = vmatpush1.msra.mxu0 0.0
    %911 = vmatprep.subr.mxu0 0.0
    %912 = vmatpush1.msra.mxu0 0.0
    %913 = vmatprep.subr.mxu0 0.0
    %914 = vmatpush1.msra.mxu0 0.0
    %915 = vmatprep.subr.mxu0 0.0
    %916 = vmatpush1.msra.mxu0 0.0
    %917 = vmatprep.subr.mxu0 0.0
    %918 = vmatpush1.msra.mxu0 0.0
    %919 = vmatprep.subr.mxu0 0.0
    %920 = vmatpush1.msra.mxu0 0.0
    %921 = vmatprep.subr.mxu0 0.0
    %922 = vmatpush1.msra.mxu0 0.0
    %923 = vmatprep.subr.mxu0 0.0
    %924 = vmatpush1.msra.mxu0 0.0
    %925 = vmatprep.subr.mxu0 0.0
    %926 = vmatpush1.msra.mxu0 0.0
    %927 = vmatprep.subr.mxu0 0.0
    %928 = vmatpush1.msra.mxu0 0.0
    %929 = vmatprep.subr.mxu0 0.0
    %930 = vmatpush1.msra.mxu0 0.0
    %931 = vmatprep.subr.mxu0 0.0
    %932 = vmatpush1.msra.mxu0 0.0
    %933 = vmatprep.subr.mxu0 0.0
    %934 = vmatpush1.msra.mxu0 0.0
    %935 = vmatprep.subr.mxu0 0.0
    %936 = vmatpush1.msra.mxu0 0.0
    %937 = vmatprep.subr.mxu0 0.0
    %938 = vmatpush1.msra.mxu0 0.0
    %939 = vmatprep.subr.mxu0 0.0
    %940 = vmatpush1.msra.mxu0 0.0
    %941 = vmatprep.subr.mxu0 0.0
    %942 = vmatpush1.msra.mxu0 0.0
    %943 = vmatprep.subr.mxu0 0.0
    %944 = vmatpush1.msra.mxu0 0.0
    %945 = vmatprep.subr.mxu0 0.0
    %946 = vmatpush1.msra.mxu0 0.0
    %947 = vmatprep.subr.mxu0 0.0
    %948 = vmatpush1.msra.mxu0 0.0
    %949 = vmatprep.subr.mxu0 0.0
    %950 = vmatpush1.msra.mxu0 0.0
    %951 = vmatprep.subr.mxu0 0.0
    %952 = vmatpush1.msra.mxu0 0.0
    %953 = vmatprep.subr.mxu0 0.0
    %954 = vmatpush1.msra.mxu0 0.0
    %955 = vmatprep.mubr.f32.mxu0 0.0
    %v956 = vand.u32 %v756, 4294901760
    %957 = vmatmul.mubr.f32.gmra.mrb[0].mxu0 %v956
    %v958 = vpop.f32.mrb[0].mxu0
    %v959 = vadd.f32 %v843, %v958
    %v960 = vpop.f32.mrb[0].mxu0
    %961 = vmatprep.mubr.f32.mxu0 0.0
    %v962 = vand.u32 %v759, 4294901760
    %963 = vmatmul.mubr.f32.gmra.mrb[0].mxu0 %v962
    %v964 = vpop.f32.mrb[0].mxu0
    %v965 = vadd.f32 %v853, %v964
    %v966 = vpop.f32.mrb[0].mxu0
    %967 = vdwg.mxu0
    %968 = vmatprep.subr.mxu0 0.0
    %v969 = vand.u32 %v748, 4294901760
    %v970 = vsub.f32 %v748, %v969
    %971 = vmatpush1.msra.mxu0 %v970
    %972 = vmatprep.subr.mxu0 0.0
    %v973 = vand.u32 %v749, 4294901760
    %v974 = vsub.f32 %v749, %v973
    %975 = vmatpush1.msra.mxu0 %v974
    %976 = vmatprep.subr.mxu0 0.0
    %v977 = vand.u32 %v750, 4294901760
    %v978 = vsub.f32 %v750, %v977
    %979 = vmatpush1.msra.mxu0 %v978
    %980 = vmatprep.subr.mxu0 0.0
    %v981 = vand.u32 %v751, 4294901760
    %v982 = vsub.f32 %v751, %v981
    %983 = vmatpush1.msra.mxu0 %v982
    %984 = vmatprep.subr.mxu0 0.0
    %v985 = vand.u32 %v752, 4294901760
    %v986 = vsub.f32 %v752, %v985
    %987 = vmatpush1.msra.mxu0 %v986
    %988 = vmatprep.subr.mxu0 0.0
    %v989 = vand.u32 %v753, 4294901760
    %v990 = vsub.f32 %v753, %v989
    %991 = vmatpush1.msra.mxu0 %v990
    %992 = vmatprep.subr.mxu0 0.0
    %v993 = vand.u32 %v762, 4294901760
    %v994 = vsub.f32 %v762, %v993
    %995 = vmatpush1.msra.mxu0 %v994
    %996 = vmatprep.subr.mxu0 0.0
    %997 = vmatpush1.msra.mxu0 0.0
    %998 = vmatprep.subr.mxu0 0.0
    %999 = vmatpush1.msra.mxu0 0.0
    %1000 = vmatprep.subr.mxu0 0.0
    %1001 = vmatpush1.msra.mxu0 0.0
    %1002 = vmatprep.subr.mxu0 0.0
    %1003 = vmatpush1.msra.mxu0 0.0
    %1004 = vmatprep.subr.mxu0 0.0
    %1005 = vmatpush1.msra.mxu0 0.0
    %1006 = vmatprep.subr.mxu0 0.0
    %1007 = vmatpush1.msra.mxu0 0.0
    %1008 = vmatprep.subr.mxu0 0.0
    %1009 = vmatpush1.msra.mxu0 0.0
    %1010 = vmatprep.subr.mxu0 0.0
    %1011 = vmatpush1.msra.mxu0 0.0
    %1012 = vmatprep.subr.mxu0 0.0
    %1013 = vmatpush1.msra.mxu0 0.0
    %1014 = vmatprep.subr.mxu0 0.0
    %1015 = vmatpush1.msra.mxu0 0.0
    %1016 = vmatprep.subr.mxu0 0.0
    %1017 = vmatpush1.msra.mxu0 0.0
    %1018 = vmatprep.subr.mxu0 0.0
    %1019 = vmatpush1.msra.mxu0 0.0
    %1020 = vmatprep.subr.mxu0 0.0
    %1021 = vmatpush1.msra.mxu0 0.0
    %1022 = vmatprep.subr.mxu0 0.0
    %1023 = vmatpush1.msra.mxu0 0.0
    %1024 = vmatprep.subr.mxu0 0.0
    %1025 = vmatpush1.msra.mxu0 0.0
    %1026 = vmatprep.subr.mxu0 0.0
    %1027 = vmatpush1.msra.mxu0 0.0
    %1028 = vmatprep.subr.mxu0 0.0
    %1029 = vmatpush1.msra.mxu0 0.0
    %1030 = vmatprep.subr.mxu0 0.0
    %1031 = vmatpush1.msra.mxu0 0.0
    %1032 = vmatprep.subr.mxu0 0.0
    %1033 = vmatpush1.msra.mxu0 0.0
    %1034 = vmatprep.subr.mxu0 0.0
    %1035 = vmatpush1.msra.mxu0 0.0
    %1036 = vmatprep.subr.mxu0 0.0
    %1037 = vmatpush1.msra.mxu0 0.0
    %1038 = vmatprep.subr.mxu0 0.0
    %1039 = vmatpush1.msra.mxu0 0.0
    %1040 = vmatprep.subr.mxu0 0.0
    %1041 = vmatpush1.msra.mxu0 0.0
    %1042 = vmatprep.subr.mxu0 0.0
    %1043 = vmatpush1.msra.mxu0 0.0
    %1044 = vmatprep.subr.mxu0 0.0
    %1045 = vmatpush1.msra.mxu0 0.0
    %1046 = vmatprep.mubr.f32.mxu0 0.0
    %v1047 = vand.u32 %v756, 4294901760
    %v1048 = vsub.f32 %v756, %v1047
    %1049 = vmatmul.mubr.f32.gmra.mrb[0].mxu0 %v1048
    %v1050 = vpop.f32.mrb[0].mxu0
    %v1051 = vadd.f32 %v959, %v1050
    %v1052 = vpop.f32.mrb[0].mxu0
    %1053 = vmatprep.mubr.f32.mxu0 0.0
    %v1054 = vand.u32 %v759, 4294901760
    %v1055 = vsub.f32 %v759, %v1054
    %1056 = vmatmul.mubr.f32.gmra.mrb[0].mxu0 %v1055
    %v1057 = vpop.f32.mrb[0].mxu0
    %v1058 = vadd.f32 %v965, %v1057
    %v1059 = vpop.f32.mrb[0].mxu0
    %1060 = vdwg.mxu0
    %1061 = vmatprep.subr.mxu0 0.0
    %v1062 = vand.u32 %v748, 4294901760
    %1063 = vmatpush1.msra.mxu0 %v1062
    %1064 = vmatprep.subr.mxu0 0.0
    %v1065 = vand.u32 %v749, 4294901760
    %1066 = vmatpush1.msra.mxu0 %v1065
    %1067 = vmatprep.subr.mxu0 0.0
    %v1068 = vand.u32 %v750, 4294901760
    %1069 = vmatpush1.msra.mxu0 %v1068
    %1070 = vmatprep.subr.mxu0 0.0
    %v1071 = vand.u32 %v751, 4294901760
    %1072 = vmatpush1.msra.mxu0 %v1071
    %1073 = vmatprep.subr.mxu0 0.0
    %v1074 = vand.u32 %v752, 4294901760
    %1075 = vmatpush1.msra.mxu0 %v1074
    %1076 = vmatprep.subr.mxu0 0.0
    %v1077 = vand.u32 %v753, 4294901760
    %1078 = vmatpush1.msra.mxu0 %v1077
    %1079 = vmatprep.subr.mxu0 0.0
    %v1080 = vand.u32 %v762, 4294901760
    %1081 = vmatpush1.msra.mxu0 %v1080
    %1082 = vmatprep.subr.mxu0 0.0
    %1083 = vmatpush1.msra.mxu0 0.0
    %1084 = vmatprep.subr.mxu0 0.0
    %1085 = vmatpush1.msra.mxu0 0.0
    %1086 = vmatprep.subr.mxu0 0.0
    %1087 = vmatpush1.msra.mxu0 0.0
    %1088 = vmatprep.subr.mxu0 0.0
    %1089 = vmatpush1.msra.mxu0 0.0
    %1090 = vmatprep.subr.mxu0 0.0
    %1091 = vmatpush1.msra.mxu0 0.0
    %1092 = vmatprep.subr.mxu0 0.0
    %1093 = vmatpush1.msra.mxu0 0.0
    %1094 = vmatprep.subr.mxu0 0.0
    %1095 = vmatpush1.msra.mxu0 0.0
    %1096 = vmatprep.subr.mxu0 0.0
    %1097 = vmatpush1.msra.mxu0 0.0
    %1098 = vmatprep.subr.mxu0 0.0
    %1099 = vmatpush1.msra.mxu0 0.0
    %1100 = vmatprep.subr.mxu0 0.0
    %1101 = vmatpush1.msra.mxu0 0.0
    %1102 = vmatprep.subr.mxu0 0.0
    %1103 = vmatpush1.msra.mxu0 0.0
    %1104 = vmatprep.subr.mxu0 0.0
    %1105 = vmatpush1.msra.mxu0 0.0
    %1106 = vmatprep.subr.mxu0 0.0
    %1107 = vmatpush1.msra.mxu0 0.0
    %1108 = vmatprep.subr.mxu0 0.0
    %1109 = vmatpush1.msra.mxu0 0.0
    %1110 = vmatprep.subr.mxu0 0.0
    %1111 = vmatpush1.msra.mxu0 0.0
    %1112 = vmatprep.subr.mxu0 0.0
    %1113 = vmatpush1.msra.mxu0 0.0
    %1114 = vmatprep.subr.mxu0 0.0
    %1115 = vmatpush1.msra.mxu0 0.0
    %1116 = vmatprep.subr.mxu0 0.0
    %1117 = vmatpush1.msra.mxu0 0.0
    %1118 = vmatprep.subr.mxu0 0.0
    %1119 = vmatpush1.msra.mxu0 0.0
    %1120 = vmatprep.subr.mxu0 0.0
    %1121 = vmatpush1.msra.mxu0 0.0
    %1122 = vmatprep.subr.mxu0 0.0
    %1123 = vmatpush1.msra.mxu0 0.0
    %1124 = vmatprep.subr.mxu0 0.0
    %1125 = vmatpush1.msra.mxu0 0.0
    %1126 = vmatprep.subr.mxu0 0.0
    %1127 = vmatpush1.msra.mxu0 0.0
    %1128 = vmatprep.subr.mxu0 0.0
    %1129 = vmatpush1.msra.mxu0 0.0
    %1130 = vmatprep.subr.mxu0 0.0
    %1131 = vmatpush1.msra.mxu0 0.0
    %1132 = vmatprep.mubr.f32.mxu0 0.0
    %v1133 = vand.u32 %v756, 4294901760
    %v1134 = vsub.f32 %v756, %v1133
    %v1135 = vand.u32 %v1134, 4294901760
    %1136 = vmatmul.mubr.f32.gmra.mrb[0].mxu0 %v1135
    %v1137 = vpop.f32.mrb[0].mxu0
    %v1138 = vadd.f32 %v1051, %v1137
    %v1139 = vpop.f32.mrb[0].mxu0
    %1140 = vmatprep.mubr.f32.mxu0 0.0
    %v1141 = vand.u32 %v759, 4294901760
    %v1142 = vsub.f32 %v759, %v1141
    %v1143 = vand.u32 %v1142, 4294901760
    %1144 = vmatmul.mubr.f32.gmra.mrb[0].mxu0 %v1143
    %v1145 = vpop.f32.mrb[0].mxu0
    %v1146 = vadd.f32 %v1058, %v1145
    %v1147 = vpop.f32.mrb[0].mxu0
    %1148 = vdwg.mxu0
    %1149 = vmatprep.subr.mxu0 0.0
    %v1150 = vand.u32 %v748, 4294901760
    %v1151 = vsub.f32 %v748, %v1150
    %v1152 = vand.u32 %v1151, 4294901760
    %1153 = vmatpush1.msra.mxu0 %v1152
    %1154 = vmatprep.subr.mxu0 0.0
    %v1155 = vand.u32 %v749, 4294901760
    %v1156 = vsub.f32 %v749, %v1155
    %v1157 = vand.u32 %v1156, 4294901760
    %1158 = vmatpush1.msra.mxu0 %v1157
    %1159 = vmatprep.subr.mxu0 0.0
    %v1160 = vand.u32 %v750, 4294901760
    %v1161 = vsub.f32 %v750, %v1160
    %v1162 = vand.u32 %v1161, 4294901760
    %1163 = vmatpush1.msra.mxu0 %v1162
    %1164 = vmatprep.subr.mxu0 0.0
    %v1165 = vand.u32 %v751, 4294901760
    %v1166 = vsub.f32 %v751, %v1165
    %v1167 = vand.u32 %v1166, 4294901760
    %1168 = vmatpush1.msra.mxu0 %v1167
    %1169 = vmatprep.subr.mxu0 0.0
    %v1170 = vand.u32 %v752, 4294901760
    %v1171 = vsub.f32 %v752, %v1170
    %v1172 = vand.u32 %v1171, 4294901760
    %1173 = vmatpush1.msra.mxu0 %v1172
    %1174 = vmatprep.subr.mxu0 0.0
    %v1175 = vand.u32 %v753, 4294901760
    %v1176 = vsub.f32 %v753, %v1175
    %v1177 = vand.u32 %v1176, 4294901760
    %1178 = vmatpush1.msra.mxu0 %v1177
    %1179 = vmatprep.subr.mxu0 0.0
    %v1180 = vand.u32 %v762, 4294901760
    %v1181 = vsub.f32 %v762, %v1180
    %v1182 = vand.u32 %v1181, 4294901760
    %1183 = vmatpush1.msra.mxu0 %v1182
    %1184 = vmatprep.subr.mxu0 0.0
    %1185 = vmatpush1.msra.mxu0 0.0
    %1186 = vmatprep.subr.mxu0 0.0
    %1187 = vmatpush1.msra.mxu0 0.0
    %1188 = vmatprep.subr.mxu0 0.0
    %1189 = vmatpush1.msra.mxu0 0.0
    %1190 = vmatprep.subr.mxu0 0.0
    %1191 = vmatpush1.msra.mxu0 0.0
    %1192 = vmatprep.subr.mxu0 0.0
    %1193 = vmatpush1.msra.mxu0 0.0
    %1194 = vmatprep.subr.mxu0 0.0
    %1195 = vmatpush1.msra.mxu0 0.0
    %1196 = vmatprep.subr.mxu0 0.0
    %1197 = vmatpush1.msra.mxu0 0.0
    %1198 = vmatprep.subr.mxu0 0.0
    %1199 = vmatpush1.msra.mxu0 0.0
    %1200 = vmatprep.subr.mxu0 0.0
    %1201 = vmatpush1.msra.mxu0 0.0
    %1202 = vmatprep.subr.mxu0 0.0
    %1203 = vmatpush1.msra.mxu0 0.0
    %1204 = vmatprep.subr.mxu0 0.0
    %1205 = vmatpush1.msra.mxu0 0.0
    %1206 = vmatprep.subr.mxu0 0.0
    %1207 = vmatpush1.msra.mxu0 0.0
    %1208 = vmatprep.subr.mxu0 0.0
    %1209 = vmatpush1.msra.mxu0 0.0
    %1210 = vmatprep.subr.mxu0 0.0
    %1211 = vmatpush1.msra.mxu0 0.0
    %1212 = vmatprep.subr.mxu0 0.0
    %1213 = vmatpush1.msra.mxu0 0.0
    %1214 = vmatprep.subr.mxu0 0.0
    %1215 = vmatpush1.msra.mxu0 0.0
    %1216 = vmatprep.subr.mxu0 0.0
    %1217 = vmatpush1.msra.mxu0 0.0
    %1218 = vmatprep.subr.mxu0 0.0
    %1219 = vmatpush1.msra.mxu0 0.0
    %1220 = vmatprep.subr.mxu0 0.0
    %1221 = vmatpush1.msra.mxu0 0.0
    %1222 = vmatprep.subr.mxu0 0.0
    %1223 = vmatpush1.msra.mxu0 0.0
    %1224 = vmatprep.subr.mxu0 0.0
    %1225 = vmatpush1.msra.mxu0 0.0
    %1226 = vmatprep.subr.mxu0 0.0
    %1227 = vmatpush1.msra.mxu0 0.0
    %1228 = vmatprep.subr.mxu0 0.0
    %1229 = vmatpush1.msra.mxu0 0.0
    %1230 = vmatprep.subr.mxu0 0.0
    %1231 = vmatpush1.msra.mxu0 0.0
    %1232 = vmatprep.subr.mxu0 0.0
    %1233 = vmatpush1.msra.mxu0 0.0
    %1234 = vmatprep.mubr.f32.mxu0 0.0
    %v1235 = vand.u32 %v756, 4294901760
    %1236 = vmatmul.mubr.f32.gmra.mrb[0].mxu0 %v1235
    %v1237 = vpop.f32.mrb[0].mxu0
    %v1238 = vadd.f32 %v1138, %v1237
    %v1239 = vpop.f32.mrb[0].mxu0
    %1240 = vmatprep.mubr.f32.mxu0 0.0
    %v1241 = vand.u32 %v759, 4294901760
    %1242 = vmatmul.mubr.f32.gmra.mrb[0].mxu0 %v1241
    %v1243 = vpop.f32.mrb[0].mxu0
    %v1244 = vadd.f32 %v1146, %v1243
    %v1245 = vpop.f32.mrb[0].mxu0
    %1246 = vdwg.mxu0
    %1247 = vmatprep.subr.mxu0 0.0
    %v1248 = vand.u32 %v748, 4294901760
    %1249 = vmatpush1.msra.mxu0 %v1248
    %1250 = vmatprep.subr.mxu0 0.0
    %v1251 = vand.u32 %v749, 4294901760
    %1252 = vmatpush1.msra.mxu0 %v1251
    %1253 = vmatprep.subr.mxu0 0.0
    %v1254 = vand.u32 %v750, 4294901760
    %1255 = vmatpush1.msra.mxu0 %v1254
    %1256 = vmatprep.subr.mxu0 0.0
    %v1257 = vand.u32 %v751, 4294901760
    %1258 = vmatpush1.msra.mxu0 %v1257
    %1259 = vmatprep.subr.mxu0 0.0
    %v1260 = vand.u32 %v752, 4294901760
    %1261 = vmatpush1.msra.mxu0 %v1260
    %1262 = vmatprep.subr.mxu0 0.0
    %v1263 = vand.u32 %v753, 4294901760
    %1264 = vmatpush1.msra.mxu0 %v1263
    %1265 = vmatprep.subr.mxu0 0.0
    %v1266 = vand.u32 %v762, 4294901760
    %1267 = vmatpush1.msra.mxu0 %v1266
    %1268 = vmatprep.subr.mxu0 0.0
    %1269 = vmatpush1.msra.mxu0 0.0
    %1270 = vmatprep.subr.mxu0 0.0
    %1271 = vmatpush1.msra.mxu0 0.0
    %1272 = vmatprep.subr.mxu0 0.0
    %1273 = vmatpush1.msra.mxu0 0.0
    %1274 = vmatprep.subr.mxu0 0.0
    %1275 = vmatpush1.msra.mxu0 0.0
    %1276 = vmatprep.subr.mxu0 0.0
    %1277 = vmatpush1.msra.mxu0 0.0
    %1278 = vmatprep.subr.mxu0 0.0
    %1279 = vmatpush1.msra.mxu0 0.0
    %1280 = vmatprep.subr.mxu0 0.0
    %1281 = vmatpush1.msra.mxu0 0.0
    %1282 = vmatprep.subr.mxu0 0.0
    %1283 = vmatpush1.msra.mxu0 0.0
    %1284 = vmatprep.subr.mxu0 0.0
    %1285 = vmatpush1.msra.mxu0 0.0
    %1286 = vmatprep.subr.mxu0 0.0
    %1287 = vmatpush1.msra.mxu0 0.0
    %1288 = vmatprep.subr.mxu0 0.0
    %1289 = vmatpush1.msra.mxu0 0.0
    %1290 = vmatprep.subr.mxu0 0.0
    %1291 = vmatpush1.msra.mxu0 0.0
    %1292 = vmatprep.subr.mxu0 0.0
    %1293 = vmatpush1.msra.mxu0 0.0
    %1294 = vmatprep.subr.mxu0 0.0
    %1295 = vmatpush1.msra.mxu0 0.0
    %1296 = vmatprep.subr.mxu0 0.0
    %1297 = vmatpush1.msra.mxu0 0.0
    %1298 = vmatprep.subr.mxu0 0.0
    %1299 = vmatpush1.msra.mxu0 0.0
    %1300 = vmatprep.subr.mxu0 0.0
    %1301 = vmatpush1.msra.mxu0 0.0
    %1302 = vmatprep.subr.mxu0 0.0
    %1303 = vmatpush1.msra.mxu0 0.0
    %1304 = vmatprep.subr.mxu0 0.0
    %1305 = vmatpush1.msra.mxu0 0.0
    %1306 = vmatprep.subr.mxu0 0.0
    %1307 = vmatpush1.msra.mxu0 0.0
    %1308 = vmatprep.subr.mxu0 0.0
    %1309 = vmatpush1.msra.mxu0 0.0
    %1310 = vmatprep.subr.mxu0 0.0
    %1311 = vmatpush1.msra.mxu0 0.0
    %1312 = vmatprep.subr.mxu0 0.0
    %1313 = vmatpush1.msra.mxu0 0.0
    %1314 = vmatprep.subr.mxu0 0.0
    %1315 = vmatpush1.msra.mxu0 0.0
    %1316 = vmatprep.subr.mxu0 0.0
    %1317 = vmatpush1.msra.mxu0 0.0
    %1318 = vmatprep.mubr.f32.mxu0 0.0
    %v1319 = vand.u32 %v756, 4294901760
    %1320 = vmatmul.mubr.f32.gmra.mrb[0].mxu0 %v1319
    %v1321 = vpop.f32.mrb[0].mxu0
    %v1322 = vadd.f32 %v1238, %v1321
    %v1323 = vpop.f32.mrb[0].mxu0
    %1324 = vmatprep.mubr.f32.mxu0 0.0
    %v1325 = vand.u32 %v759, 4294901760
    %1326 = vmatmul.mubr.f32.gmra.mrb[0].mxu0 %v1325
    %v1327 = vpop.f32.mrb[0].mxu0
    %v1328 = vadd.f32 %v1244, %v1327
    %v1329 = vpop.f32.mrb[0].mxu0
    %1330 = vdwg.mxu0
    %v1331 = vmul.f32 %v1322, %v745
    %vm1332 = vcmask 261120
    %v1333 = vsel %vm1332, %v1331, 0.0
    %1334 = vadd.xlane.f32.xlu0 %v1333
    %v1335 = vpop.xlane.xlu0 %1334
    %v1336 = vmul.f32 %v1328, %v745
    %v1337 = vsel %vm1332, %v1336, 0.0
    %1338 = vadd.xlane.f32.xlu0 %v1337
    %v1339 = vpop.xlane.xlu0 %1338
    %v1340 = vsub.f32 0.0, %v1339
    %vm1341 = vcmask 7168
    %v1342 = vsel %vm1341, %v1335, %v1340
    %v1343 = vmin.f32 %v1342, 0.0
    %v1344 = vand.u32 2147483647, %v1342
    %v1345 = vsub.f32 0.0, %v1344
    %v1346 = vmul.f32 %v1345, 1.442695
    %v1347 = vpow.pop %v1346
    %v1348 = vadd.f32 %v1347, 1.0
    %v1349 = vlog2.pop %v1348
    %v1350 = vmul.f32 %v1349, 0.6931472
    %v1351 = vmul.f32 -0.5, %v1347
    %v1352 = vadd.f32 %v1351, 1.0
    %v1353 = vmul.f32 %v1352, %v1347
    %v1354 = vand.u32 2147483647, %v1347
    %vm1355 = vcmp.lt.f32.partialorder %v1354, 0.0004427343
    %v1356 = vsel %vm1355, %v1353, %v1350
    %v1357 = vsub.f32 %v1343, %v1356
    %vm1358 = vcmask 15360
    %v1359 = vsel %vm1358, %v1357, 0.0
    %1360 = vadd.xlane.f32.xlu0 %v1359
    %v1361 = vpop.xlane.xlu0 %1360
    %s1362 = smul.u32 0, 8
    %v1363 = vlaneseq
    %v1364 = vshrl.u32 %v1363, 7
    %v1365 = vstv %s1362
    %v1366 = vadd.s32 %v1365, %v1364
    %vm1367 = vcmp.lt.s32.totalorder %v1366, 8
    %v1368 = vsel %vm1367, %v1361, 0.0
    %v1369 = vld [vmem:[#allocation5] sm:$0x1]
    %v1370 = vrot.slane %v1368, 4
    %v1371 = vadd.f32 %v1368, %v1370
    %v1372 = vrot.slane %v1371, 2
    %v1373 = vadd.f32 %v1371, %v1372
    %v1374 = vrot.slane %v1373, 1
    %v1375 = vadd.f32 %v1373, %v1374
    %v1376 = vadd.f32 %v1369, %v1375
    %vm1377 = vcmask 0
    %1378 = vst.msk [vmem:[#allocation5] sm:$0x1] %vm1377, %v1376
    // Predicated region
    $region92: #{tpu_custom_call.1} parent=1 // pred_check
      %p1379 = pneg %p17
    $region93: #{tpu_custom_call.1} parent=1 // pred_check_branch
      %1381 = sbr.rel (%p1379) target = $region95
    $region94: #{tpu_custom_call.1} parent=1 // pred_region
      %v1382 = vld [vmem:[#allocation5] sm:$0x1]
      %v1383 = vsub.f32 0.0, %v1382
      %v1384 = vrcp.pop 8.0
      %v1385 = vmul.f32 %v1383, %v1384
      %1386 = vst.msk [vmem:[#allocation6] sm:$0x1] %vm1377, %v1385
    $region95: #{tpu_custom_call.1} parent=1 // pred_fallthru
      _
    // Predicated region
    $region96: #{tpu_custom_call.1} parent=1 // pred_check
      _
    $region97: #{tpu_custom_call.1} parent=1 // pred_check_branch
      %1388 = sbr.rel (0) target = $region99
    $region98: #{tpu_custom_call.1} parent=1 // pred_region
      %s1390 = ssub.s32 16, 16
      %1391 = vsyncadd [#allocation7], %s1390
      %s1393 = sshll.u32 [#allocation6], 4
      %s1394 = int_to_ptr.vmem [resolvable:$true] %s1393
      %1396 = dma.vmem_to_hbm [thread:$0]  %s1394, 16, %s5, [#allocation7]
    $region99: #{tpu_custom_call.1} parent=1 // pred_fallthru
      _
    // Predicated region
    $region100: #{tpu_custom_call.1} parent=1 // pred_check
      _
    $region101: #{tpu_custom_call.1} parent=1 // pred_check_branch
      %1398 = sbr.rel (0) target = $region103
    $region102: #{tpu_custom_call.1} parent=1 // pred_region
      %1399 = dma.done [#allocation7], 16
    $region103: #{tpu_custom_call.1} parent=1 // pred_fallthru
      _
    %1400 = vsyncpa [#allocation7], 1
  %1401 = vsyncmov [#allocation4]
  %s1402 = vpop.sfrf %1401
  %p1403 = scmp.eq.s32.totalorder %s1402, 0
  %p1404 = pneg %p1403
  %1406 = shalt.err (%p1404)
  %s1407 = scalar_lea.sflag [#allocation4], 1
  %1408 = vsyncmov %s1407
  %s1409 = vpop.sfrf %1408
  %p1410 = scmp.eq.s32.totalorder %s1409, 0
  %p1411 = pneg %p1410
  %1413 = shalt.err (%p1411)

</llo_original>
